<compile_context>
chip_gen: v5e
topology: v5e:2x2
jax: 0.10.0
libtpu: 0.0.40
codegen_flags: <defaults>
</compile_context>

<pallas_src>
import numpy as np
import jax
import jax.numpy as jnp
from jax import lax
from jax.experimental import pallas as pl
from jax.experimental.pallas import tpu as pltpu

# Problem sizes implied by the module: fc1 expects 144 = 16 * 3 * 3 features,
# which forces an 8x8 spatial input ( ((8-1)-1)//2 = 3 ).
B, CIN, H, W = 2, 4, 8, 8
KH = KW = 2
C1, C2 = 30, 16
H1, W1 = H - KH + 1, W - KW + 1          # 7, 7   conv1 output
H2, W2 = H1 - KH + 1, W1 - KW + 1        # 6, 6   conv2 output
HP, WP = H2 // 2, W2 // 2                # 3, 3   maxpool output
FC_IN, FC_OUT = C2 * HP * WP, 84         # 144, 84

# Static guards for the full-width ("junk column") roll trick and the
# layout-no-op reshapes; a shape change must fail here, not silently read junk.
assert FC_IN == 144, "fc1 expects 144 inputs -> forces an 8x8 spatial input"
assert W % 8 == 0, "W must be sublane-aligned for the no-op (H*, W, C) reshapes"
assert H2 % 2 == 0 and W2 % 2 == 0, "maxpool(2,2) must tile the conv2 output"
assert W1 <= W - 1 and W2 <= W - 2, (
    "columns wrapped by the kj-roll must lie outside the valid conv regions")
assert (KH - 1) + H1 <= H and (KH - 1) + H2 <= H1
assert 2 * HP <= H2 and 2 * WP <= W2


def net_kernel(x_ref, w1_ref, b1_ref, w2_ref, b2_ref, wfc_ref, bfc_ref, out_ref):
    # x_ref:   (B*CIN, H*W)        NCHW data, contiguously reshaped (no relayout)
    # w1_ref:  (KH*KW, CIN, C1)    conv1 weight, tap-major (t = ki*KW + kj)
    # w2_ref:  (KH*KW, C1, C2)     conv2 weight, tap-major
    # wfc_ref: (HP*WP, C2, FC_OUT) fc1 weight per pooled position (p*WP + q)
    # b1_ref:  (1, 1, C1)   b2_ref: (1, 1, C2)   bfc_ref: (1, FC_OUT)
    # out_ref: (B, FC_OUT)
    for b in range(B):                                       # B = 2, unrolled
        xb = x_ref[b * CIN:(b + 1) * CIN, :]                 # (CIN, H*W) channel-major

        # ---- conv1: 4 accumulated per-tap matmuls.  The transposed-LHS
        # dot_general contracts over CIN and simultaneously turns the corner
        # from channel-major input to row-major (spatial rows, channel lanes).
        c1 = None
        for ki in range(KH):
            for kj in range(KW):
                t = ki * KW + kj
                y = lax.dot_general(xb, w1_ref[t],            # (H*W, C1)
                                    (((0,), (0,)), ((), ())),
                                    preferred_element_type=jnp.float32)
                y = y.reshape(H, W, C1)                       # layout no-op (W=8)
                if kj:
                    # w -> w+kj ; the wrap only lands in the junk column.
                    y = pltpu.roll(y, shift=W - kj, axis=1)
                part = y[ki:ki + H1]                          # h -> h+ki (free slice)
                c1 = part if c1 is None else c1 + part
        c1 = jnp.maximum(c1 + b1_ref[...], 0.0)               # (H1, W, C1)
        c1_2d = c1.reshape(H1 * W, C1)                        # layout no-op

        # ---- conv2: same structure, standard (rows x channels) matmuls.
        c2 = None
        for ki in range(KH):
            for kj in range(KW):
                t = ki * KW + kj
                y = jnp.dot(c1_2d, w2_ref[t],                 # (H1*W, C2)
                            preferred_element_type=jnp.float32)
                y = y.reshape(H1, W, C2)                      # layout no-op
                if kj:
                    y = pltpu.roll(y, shift=W - kj, axis=1)
                part = y[ki:ki + H2]                          # (H2, W, C2)
                c2 = part if c2 is None else c2 + part
        c2 = jnp.maximum(c2 + b2_ref[...], 0.0)               # (H2, W, C2)

        # ---- maxpool 2x2 stride 2 + fc1 as HP*WP accumulated (1,C2)x(C2,84)
        # dots (per-(p,q) weight slices -> no 144-wide lane concatenation).
        acc = bfc_ref[...]                                     # (1, FC_OUT)
        for p in range(HP):
            rmax = jnp.maximum(c2[2 * p], c2[2 * p + 1])       # (W, C2) row-pair max
            for q in range(WP):
                pooled = jnp.maximum(rmax[2 * q:2 * q + 1, :],
                                     rmax[2 * q + 1:2 * q + 2, :])   # (1, C2)
                acc = acc + jnp.dot(pooled, wfc_ref[p * WP + q],
                                    preferred_element_type=jnp.float32)
        out_ref[b:b + 1, :] = jnp.maximum(acc, 0.0)


def prepare_params(params):
    """One-time (outside the hot path) weight repacking for the kernel."""
    w1_pt, b1, w2_pt, b2, wfc_pt, bfc = params
    # conv weights: (Cout, Cin, kh, kw) -> (kh*kw, Cin, Cout), tap-major
    w1_r = jnp.transpose(w1_pt, (2, 3, 1, 0)).reshape(KH * KW, CIN, C1)
    w2_r = jnp.transpose(w2_pt, (2, 3, 1, 0)).reshape(KH * KW, C1, C2)
    # fc weight: PyTorch flatten index (c, p, q) -> per-(p,q) slices (c, out)
    wfc_r = jnp.transpose(wfc_pt.reshape(FC_OUT, C2, HP, WP),
                          (2, 3, 1, 0)).reshape(HP * WP, C2, FC_OUT)
    return (w1_r, b1.reshape(1, 1, C1), w2_r, b2.reshape(1, 1, C2),
            wfc_r, bfc.reshape(1, FC_OUT))


@jax.jit
def net_forward(x_nchw, prepped):
    """x_nchw: (B, CIN, H, W) float32 -> (B, 84) float32."""
    w1_r, b1_r, w2_r, b2_r, wfc_r, bfc_r = prepped
    # Contiguous row-major reshape only (metadata/bitcast) -- unlike the previous
    # version there is no NCHW->NHWC transpose op and no post-call slice op.
    x2 = x_nchw.reshape(B * CIN, H * W)
    # Gridless single call: total resident data is ~0.1 MiB, far below any
    # generation's VMEM.  (If B ever grows, add a "parallel" batch grid axis to
    # engage v7x's second TensorCore; not worth the per-step overhead at B=2.)
    return pl.pallas_call(
        net_kernel,
        out_shape=jax.ShapeDtypeStruct((B, FC_OUT), jnp.float32),
        in_specs=[pl.BlockSpec(memory_space=pltpu.MemorySpace.VMEM)] * 7,
        out_specs=pl.BlockSpec(memory_space=pltpu.MemorySpace.VMEM),
    )(x2, w1_r, b1_r, w2_r, b2_r, wfc_r, bfc_r)


def net_reference(x_nchw, params):
    """Pure-JAX reference matching the PyTorch forward exactly."""
    w1_pt, b1, w2_pt, b2, wfc_pt, bfc = params
    x = jnp.transpose(x_nchw, (0, 2, 3, 1))
    dn = ('NHWC', 'HWIO', 'NHWC')
    y = lax.conv_general_dilated(x, jnp.transpose(w1_pt, (2, 3, 1, 0)),
                                 (1, 1), 'VALID', dimension_numbers=dn) + b1
    y = jnp.maximum(y, 0.0)
    y = lax.conv_general_dilated(y, jnp.transpose(w2_pt, (2, 3, 1, 0)),
                                 (1, 1), 'VALID', dimension_numbers=dn) + b2
    y = jnp.maximum(y, 0.0)
    y = lax.reduce_window(y, -jnp.inf, lax.max,
                          (1, 2, 2, 1), (1, 2, 2, 1), 'VALID')
    y = jnp.transpose(y, (0, 3, 1, 2)).reshape(B, FC_IN)   # torch .view(-1, 144)
    return jnp.maximum(y @ wfc_pt.T + bfc, 0.0)


if __name__ == "__main__":
    key = jax.random.PRNGKey(0)
    ks = jax.random.split(key, 7)

    def uni(k, shape, fan_in):
        bound = 1.0 / np.sqrt(fan_in)
        return jax.random.uniform(k, shape, jnp.float32, -bound, bound)

    # PyTorch-style deterministic parameter init (uniform +-1/sqrt(fan_in)).
    w1_pt = uni(ks[0], (C1, CIN, KH, KW), CIN * KH * KW)
    b1 = uni(ks[1], (C1,), CIN * KH * KW)
    w2_pt = uni(ks[2], (C2, C1, KH, KW), C1 * KH * KW)
    b2 = uni(ks[3], (C2,), C1 * KH * KW)
    wfc_pt = uni(ks[4], (FC_OUT, FC_IN), FC_IN)
    bfc = uni(ks[5], (FC_OUT,), FC_IN)
    x = jax.random.normal(ks[6], (B, CIN, H, W), jnp.float32)

    params = (w1_pt, b1, w2_pt, b2, wfc_pt, bfc)
    prepped = jax.block_until_ready(prepare_params(params))   # hoisted, one-time

    out = jax.block_until_ready(net_forward(x, prepped))
    ref = net_reference(x, params)
    np.testing.assert_allclose(np.asarray(out), np.asarray(ref),
                               rtol=1e-4, atol=1e-4)
    # TODO(synk): nn.AdaptiveAvgPool2d((1,16)) is defined in __init__ but never
    # used in forward(), so it is intentionally not implemented.
    print("KERNEL_OK")
</pallas_src>

<mosaic_0001>
module attributes {stable_mosaic.version = 11 : i64} {
  func.func @net_kernel(%arg0: memref<8x64xf32, #tpu.memory_space<vmem>>, %arg1: memref<4x4x30xf32, #tpu.memory_space<vmem>>, %arg2: memref<1x1x30xf32, #tpu.memory_space<vmem>>, %arg3: memref<4x30x16xf32, #tpu.memory_space<vmem>>, %arg4: memref<1x1x16xf32, #tpu.memory_space<vmem>>, %arg5: memref<9x16x84xf32, #tpu.memory_space<vmem>>, %arg6: memref<1x84xf32, #tpu.memory_space<vmem>>, %arg7: memref<2x84xf32, #tpu.memory_space<vmem>>) attributes {dimension_semantics = [], scalar_prefetch = 0 : i64, scratch_operands = 0 : i64, tpu.core_type = #tpu.core_type<tc>} {
    %c0 = arith.constant 0 : index
    %c0_0 = arith.constant 0 : index
    %0 = vector.load %arg0[%c0, %c0_0] : memref<8x64xf32, #tpu.memory_space<vmem>>, vector<4x64xf32>
    %c0_1 = arith.constant 0 : index
    %c0_2 = arith.constant 0 : index
    %c0_3 = arith.constant 0 : index
    %1 = vector.load %arg1[%c0_1, %c0_2, %c0_3] : memref<4x4x30xf32, #tpu.memory_space<vmem>>, vector<1x4x30xf32>
    %2 = vector.shape_cast %1 : vector<1x4x30xf32> to vector<4x30xf32>
    %cst = arith.constant dense<0.000000e+00> : vector<64x30xf32>
    %3 = tpu.matmul %0, %2, %cst {dimension_numbers = #tpu.dot_dimension_numbers<[0], [0], [1], [1], [0, 1, 1, 1], [], []>} : vector<4x64xf32>, vector<4x30xf32>, vector<64x30xf32> -> vector<64x30xf32>
    %4 = vector.shape_cast %3 : vector<64x30xf32> to vector<8x8x30xf32>
    %5 = vector.extract_strided_slice %4 {offsets = [0, 0, 0], sizes = [7, 8, 30], strides = [1, 1, 1]} : vector<8x8x30xf32> to vector<7x8x30xf32>
    %c1 = arith.constant 1 : index
    %c0_4 = arith.constant 0 : index
    %c0_5 = arith.constant 0 : index
    %6 = vector.load %arg1[%c1, %c0_4, %c0_5] : memref<4x4x30xf32, #tpu.memory_space<vmem>>, vector<1x4x30xf32>
    %7 = vector.shape_cast %6 : vector<1x4x30xf32> to vector<4x30xf32>
    %cst_6 = arith.constant dense<0.000000e+00> : vector<64x30xf32>
    %8 = tpu.matmul %0, %7, %cst_6 {dimension_numbers = #tpu.dot_dimension_numbers<[0], [0], [1], [1], [0, 1, 1, 1], [], []>} : vector<4x64xf32>, vector<4x30xf32>, vector<64x30xf32> -> vector<64x30xf32>
    %9 = vector.shape_cast %8 : vector<64x30xf32> to vector<8x8x30xf32>
    %c7_i32 = arith.constant 7 : i32
    %10 = tpu.dynamic_rotate %9 by %c7_i32 dim 1 : vector<8x8x30xf32>, i32 -> vector<8x8x30xf32>
    %11 = vector.extract_strided_slice %10 {offsets = [0, 0, 0], sizes = [7, 8, 30], strides = [1, 1, 1]} : vector<8x8x30xf32> to vector<7x8x30xf32>
    %12 = arith.addf %5, %11 : vector<7x8x30xf32>
    %c2 = arith.constant 2 : index
    %c0_7 = arith.constant 0 : index
    %c0_8 = arith.constant 0 : index
    %13 = vector.load %arg1[%c2, %c0_7, %c0_8] : memref<4x4x30xf32, #tpu.memory_space<vmem>>, vector<1x4x30xf32>
    %14 = vector.shape_cast %13 : vector<1x4x30xf32> to vector<4x30xf32>
    %cst_9 = arith.constant dense<0.000000e+00> : vector<64x30xf32>
    %15 = tpu.matmul %0, %14, %cst_9 {dimension_numbers = #tpu.dot_dimension_numbers<[0], [0], [1], [1], [0, 1, 1, 1], [], []>} : vector<4x64xf32>, vector<4x30xf32>, vector<64x30xf32> -> vector<64x30xf32>
    %16 = vector.shape_cast %15 : vector<64x30xf32> to vector<8x8x30xf32>
    %17 = vector.extract_strided_slice %16 {offsets = [1, 0, 0], sizes = [7, 8, 30], strides = [1, 1, 1]} : vector<8x8x30xf32> to vector<7x8x30xf32>
    %18 = arith.addf %12, %17 : vector<7x8x30xf32>
    %c3 = arith.constant 3 : index
    %c0_10 = arith.constant 0 : index
    %c0_11 = arith.constant 0 : index
    %19 = vector.load %arg1[%c3, %c0_10, %c0_11] : memref<4x4x30xf32, #tpu.memory_space<vmem>>, vector<1x4x30xf32>
    %20 = vector.shape_cast %19 : vector<1x4x30xf32> to vector<4x30xf32>
    %cst_12 = arith.constant dense<0.000000e+00> : vector<64x30xf32>
    %21 = tpu.matmul %0, %20, %cst_12 {dimension_numbers = #tpu.dot_dimension_numbers<[0], [0], [1], [1], [0, 1, 1, 1], [], []>} : vector<4x64xf32>, vector<4x30xf32>, vector<64x30xf32> -> vector<64x30xf32>
    %22 = vector.shape_cast %21 : vector<64x30xf32> to vector<8x8x30xf32>
    %c7_i32_13 = arith.constant 7 : i32
    %23 = tpu.dynamic_rotate %22 by %c7_i32_13 dim 1 : vector<8x8x30xf32>, i32 -> vector<8x8x30xf32>
    %24 = vector.extract_strided_slice %23 {offsets = [1, 0, 0], sizes = [7, 8, 30], strides = [1, 1, 1]} : vector<8x8x30xf32> to vector<7x8x30xf32>
    %25 = arith.addf %18, %24 : vector<7x8x30xf32>
    %c0_14 = arith.constant 0 : index
    %c0_15 = arith.constant 0 : index
    %c0_16 = arith.constant 0 : index
    %26 = vector.load %arg2[%c0_14, %c0_15, %c0_16] : memref<1x1x30xf32, #tpu.memory_space<vmem>>, vector<1x1x30xf32>
    %27 = vector.broadcast %26 : vector<1x1x30xf32> to vector<7x8x30xf32>
    %28 = arith.addf %25, %27 : vector<7x8x30xf32>
    %cst_17 = arith.constant 0.000000e+00 : f32
    %29 = vector.broadcast %cst_17 : f32 to vector<7x8x30xf32>
    %30 = arith.maximumf %28, %29 : vector<7x8x30xf32>
    %31 = vector.shape_cast %30 : vector<7x8x30xf32> to vector<56x30xf32>
    %c0_18 = arith.constant 0 : index
    %c0_19 = arith.constant 0 : index
    %c0_20 = arith.constant 0 : index
    %32 = vector.load %arg3[%c0_18, %c0_19, %c0_20] : memref<4x30x16xf32, #tpu.memory_space<vmem>>, vector<1x30x16xf32>
    %33 = vector.shape_cast %32 : vector<1x30x16xf32> to vector<30x16xf32>
    %cst_21 = arith.constant dense<0.000000e+00> : vector<56x16xf32>
    %34 = tpu.matmul %31, %33, %cst_21 {dimension_numbers = #tpu.dot_dimension_numbers<[1], [0], [0], [1], [0, 0, 1, 1], [], []>} : vector<56x30xf32>, vector<30x16xf32>, vector<56x16xf32> -> vector<56x16xf32>
    %35 = vector.shape_cast %34 : vector<56x16xf32> to vector<7x8x16xf32>
    %36 = vector.extract_strided_slice %35 {offsets = [0, 0, 0], sizes = [6, 8, 16], strides = [1, 1, 1]} : vector<7x8x16xf32> to vector<6x8x16xf32>
    %c1_22 = arith.constant 1 : index
    %c0_23 = arith.constant 0 : index
    %c0_24 = arith.constant 0 : index
    %37 = vector.load %arg3[%c1_22, %c0_23, %c0_24] : memref<4x30x16xf32, #tpu.memory_space<vmem>>, vector<1x30x16xf32>
    %38 = vector.shape_cast %37 : vector<1x30x16xf32> to vector<30x16xf32>
    %cst_25 = arith.constant dense<0.000000e+00> : vector<56x16xf32>
    %39 = tpu.matmul %31, %38, %cst_25 {dimension_numbers = #tpu.dot_dimension_numbers<[1], [0], [0], [1], [0, 0, 1, 1], [], []>} : vector<56x30xf32>, vector<30x16xf32>, vector<56x16xf32> -> vector<56x16xf32>
    %40 = vector.shape_cast %39 : vector<56x16xf32> to vector<7x8x16xf32>
    %c7_i32_26 = arith.constant 7 : i32
    %41 = tpu.dynamic_rotate %40 by %c7_i32_26 dim 1 : vector<7x8x16xf32>, i32 -> vector<7x8x16xf32>
    %42 = vector.extract_strided_slice %41 {offsets = [0, 0, 0], sizes = [6, 8, 16], strides = [1, 1, 1]} : vector<7x8x16xf32> to vector<6x8x16xf32>
    %43 = arith.addf %36, %42 : vector<6x8x16xf32>
    %c2_27 = arith.constant 2 : index
    %c0_28 = arith.constant 0 : index
    %c0_29 = arith.constant 0 : index
    %44 = vector.load %arg3[%c2_27, %c0_28, %c0_29] : memref<4x30x16xf32, #tpu.memory_space<vmem>>, vector<1x30x16xf32>
    %45 = vector.shape_cast %44 : vector<1x30x16xf32> to vector<30x16xf32>
    %cst_30 = arith.constant dense<0.000000e+00> : vector<56x16xf32>
    %46 = tpu.matmul %31, %45, %cst_30 {dimension_numbers = #tpu.dot_dimension_numbers<[1], [0], [0], [1], [0, 0, 1, 1], [], []>} : vector<56x30xf32>, vector<30x16xf32>, vector<56x16xf32> -> vector<56x16xf32>
    %47 = vector.shape_cast %46 : vector<56x16xf32> to vector<7x8x16xf32>
    %48 = vector.extract_strided_slice %47 {offsets = [1, 0, 0], sizes = [6, 8, 16], strides = [1, 1, 1]} : vector<7x8x16xf32> to vector<6x8x16xf32>
    %49 = arith.addf %43, %48 : vector<6x8x16xf32>
    %c3_31 = arith.constant 3 : index
    %c0_32 = arith.constant 0 : index
    %c0_33 = arith.constant 0 : index
    %50 = vector.load %arg3[%c3_31, %c0_32, %c0_33] : memref<4x30x16xf32, #tpu.memory_space<vmem>>, vector<1x30x16xf32>
    %51 = vector.shape_cast %50 : vector<1x30x16xf32> to vector<30x16xf32>
    %cst_34 = arith.constant dense<0.000000e+00> : vector<56x16xf32>
    %52 = tpu.matmul %31, %51, %cst_34 {dimension_numbers = #tpu.dot_dimension_numbers<[1], [0], [0], [1], [0, 0, 1, 1], [], []>} : vector<56x30xf32>, vector<30x16xf32>, vector<56x16xf32> -> vector<56x16xf32>
    %53 = vector.shape_cast %52 : vector<56x16xf32> to vector<7x8x16xf32>
    %c7_i32_35 = arith.constant 7 : i32
    %54 = tpu.dynamic_rotate %53 by %c7_i32_35 dim 1 : vector<7x8x16xf32>, i32 -> vector<7x8x16xf32>
    %55 = vector.extract_strided_slice %54 {offsets = [1, 0, 0], sizes = [6, 8, 16], strides = [1, 1, 1]} : vector<7x8x16xf32> to vector<6x8x16xf32>
    %56 = arith.addf %49, %55 : vector<6x8x16xf32>
    %c0_36 = arith.constant 0 : index
    %c0_37 = arith.constant 0 : index
    %c0_38 = arith.constant 0 : index
    %57 = vector.load %arg4[%c0_36, %c0_37, %c0_38] : memref<1x1x16xf32, #tpu.memory_space<vmem>>, vector<1x1x16xf32>
    %58 = vector.broadcast %57 : vector<1x1x16xf32> to vector<6x8x16xf32>
    %59 = arith.addf %56, %58 : vector<6x8x16xf32>
    %cst_39 = arith.constant 0.000000e+00 : f32
    %60 = vector.broadcast %cst_39 : f32 to vector<6x8x16xf32>
    %61 = arith.maximumf %59, %60 : vector<6x8x16xf32>
    %c0_40 = arith.constant 0 : index
    %c0_41 = arith.constant 0 : index
    %62 = vector.load %arg6[%c0_40, %c0_41] : memref<1x84xf32, #tpu.memory_space<vmem>>, vector<1x84xf32>
    %63 = vector.extract_strided_slice %61 {offsets = [0, 0, 0], sizes = [1, 8, 16], strides = [1, 1, 1]} : vector<6x8x16xf32> to vector<1x8x16xf32>
    %64 = vector.shape_cast %63 : vector<1x8x16xf32> to vector<8x16xf32>
    %65 = vector.extract_strided_slice %61 {offsets = [1, 0, 0], sizes = [1, 8, 16], strides = [1, 1, 1]} : vector<6x8x16xf32> to vector<1x8x16xf32>
    %66 = vector.shape_cast %65 : vector<1x8x16xf32> to vector<8x16xf32>
    %67 = arith.maximumf %64, %66 : vector<8x16xf32>
    %68 = vector.extract_strided_slice %67 {offsets = [0, 0], sizes = [1, 16], strides = [1, 1]} : vector<8x16xf32> to vector<1x16xf32>
    %69 = vector.extract_strided_slice %67 {offsets = [1, 0], sizes = [1, 16], strides = [1, 1]} : vector<8x16xf32> to vector<1x16xf32>
    %70 = arith.maximumf %68, %69 : vector<1x16xf32>
    %c0_42 = arith.constant 0 : index
    %c0_43 = arith.constant 0 : index
    %c0_44 = arith.constant 0 : index
    %71 = vector.load %arg5[%c0_42, %c0_43, %c0_44] : memref<9x16x84xf32, #tpu.memory_space<vmem>>, vector<1x16x84xf32>
    %72 = vector.shape_cast %71 : vector<1x16x84xf32> to vector<16x84xf32>
    %cst_45 = arith.constant dense<0.000000e+00> : vector<1x84xf32>
    %73 = tpu.matmul %70, %72, %cst_45 {dimension_numbers = #tpu.dot_dimension_numbers<[1], [0], [0], [1], [0, 0, 1, 1], [], []>} : vector<1x16xf32>, vector<16x84xf32>, vector<1x84xf32> -> vector<1x84xf32>
    %74 = arith.addf %62, %73 : vector<1x84xf32>
    %75 = vector.extract_strided_slice %67 {offsets = [2, 0], sizes = [1, 16], strides = [1, 1]} : vector<8x16xf32> to vector<1x16xf32>
    %76 = vector.extract_strided_slice %67 {offsets = [3, 0], sizes = [1, 16], strides = [1, 1]} : vector<8x16xf32> to vector<1x16xf32>
    %77 = arith.maximumf %75, %76 : vector<1x16xf32>
    %c1_46 = arith.constant 1 : index
    %c0_47 = arith.constant 0 : index
    %c0_48 = arith.constant 0 : index
    %78 = vector.load %arg5[%c1_46, %c0_47, %c0_48] : memref<9x16x84xf32, #tpu.memory_space<vmem>>, vector<1x16x84xf32>
    %79 = vector.shape_cast %78 : vector<1x16x84xf32> to vector<16x84xf32>
    %cst_49 = arith.constant dense<0.000000e+00> : vector<1x84xf32>
    %80 = tpu.matmul %77, %79, %cst_49 {dimension_numbers = #tpu.dot_dimension_numbers<[1], [0], [0], [1], [0, 0, 1, 1], [], []>} : vector<1x16xf32>, vector<16x84xf32>, vector<1x84xf32> -> vector<1x84xf32>
    %81 = arith.addf %74, %80 : vector<1x84xf32>
    %82 = vector.extract_strided_slice %67 {offsets = [4, 0], sizes = [1, 16], strides = [1, 1]} : vector<8x16xf32> to vector<1x16xf32>
    %83 = vector.extract_strided_slice %67 {offsets = [5, 0], sizes = [1, 16], strides = [1, 1]} : vector<8x16xf32> to vector<1x16xf32>
    %84 = arith.maximumf %82, %83 : vector<1x16xf32>
    %c2_50 = arith.constant 2 : index
    %c0_51 = arith.constant 0 : index
    %c0_52 = arith.constant 0 : index
    %85 = vector.load %arg5[%c2_50, %c0_51, %c0_52] : memref<9x16x84xf32, #tpu.memory_space<vmem>>, vector<1x16x84xf32>
    %86 = vector.shape_cast %85 : vector<1x16x84xf32> to vector<16x84xf32>
    %cst_53 = arith.constant dense<0.000000e+00> : vector<1x84xf32>
    %87 = tpu.matmul %84, %86, %cst_53 {dimension_numbers = #tpu.dot_dimension_numbers<[1], [0], [0], [1], [0, 0, 1, 1], [], []>} : vector<1x16xf32>, vector<16x84xf32>, vector<1x84xf32> -> vector<1x84xf32>
    %88 = arith.addf %81, %87 : vector<1x84xf32>
    %89 = vector.extract_strided_slice %61 {offsets = [2, 0, 0], sizes = [1, 8, 16], strides = [1, 1, 1]} : vector<6x8x16xf32> to vector<1x8x16xf32>
    %90 = vector.shape_cast %89 : vector<1x8x16xf32> to vector<8x16xf32>
    %91 = vector.extract_strided_slice %61 {offsets = [3, 0, 0], sizes = [1, 8, 16], strides = [1, 1, 1]} : vector<6x8x16xf32> to vector<1x8x16xf32>
    %92 = vector.shape_cast %91 : vector<1x8x16xf32> to vector<8x16xf32>
    %93 = arith.maximumf %90, %92 : vector<8x16xf32>
    %94 = vector.extract_strided_slice %93 {offsets = [0, 0], sizes = [1, 16], strides = [1, 1]} : vector<8x16xf32> to vector<1x16xf32>
    %95 = vector.extract_strided_slice %93 {offsets = [1, 0], sizes = [1, 16], strides = [1, 1]} : vector<8x16xf32> to vector<1x16xf32>
    %96 = arith.maximumf %94, %95 : vector<1x16xf32>
    %c3_54 = arith.constant 3 : index
    %c0_55 = arith.constant 0 : index
    %c0_56 = arith.constant 0 : index
    %97 = vector.load %arg5[%c3_54, %c0_55, %c0_56] : memref<9x16x84xf32, #tpu.memory_space<vmem>>, vector<1x16x84xf32>
    %98 = vector.shape_cast %97 : vector<1x16x84xf32> to vector<16x84xf32>
    %cst_57 = arith.constant dense<0.000000e+00> : vector<1x84xf32>
    %99 = tpu.matmul %96, %98, %cst_57 {dimension_numbers = #tpu.dot_dimension_numbers<[1], [0], [0], [1], [0, 0, 1, 1], [], []>} : vector<1x16xf32>, vector<16x84xf32>, vector<1x84xf32> -> vector<1x84xf32>
    %100 = arith.addf %88, %99 : vector<1x84xf32>
    %101 = vector.extract_strided_slice %93 {offsets = [2, 0], sizes = [1, 16], strides = [1, 1]} : vector<8x16xf32> to vector<1x16xf32>
    %102 = vector.extract_strided_slice %93 {offsets = [3, 0], sizes = [1, 16], strides = [1, 1]} : vector<8x16xf32> to vector<1x16xf32>
    %103 = arith.maximumf %101, %102 : vector<1x16xf32>
    %c4 = arith.constant 4 : index
    %c0_58 = arith.constant 0 : index
    %c0_59 = arith.constant 0 : index
    %104 = vector.load %arg5[%c4, %c0_58, %c0_59] : memref<9x16x84xf32, #tpu.memory_space<vmem>>, vector<1x16x84xf32>
    %105 = vector.shape_cast %104 : vector<1x16x84xf32> to vector<16x84xf32>
    %cst_60 = arith.constant dense<0.000000e+00> : vector<1x84xf32>
    %106 = tpu.matmul %103, %105, %cst_60 {dimension_numbers = #tpu.dot_dimension_numbers<[1], [0], [0], [1], [0, 0, 1, 1], [], []>} : vector<1x16xf32>, vector<16x84xf32>, vector<1x84xf32> -> vector<1x84xf32>
    %107 = arith.addf %100, %106 : vector<1x84xf32>
    %108 = vector.extract_strided_slice %93 {offsets = [4, 0], sizes = [1, 16], strides = [1, 1]} : vector<8x16xf32> to vector<1x16xf32>
    %109 = vector.extract_strided_slice %93 {offsets = [5, 0], sizes = [1, 16], strides = [1, 1]} : vector<8x16xf32> to vector<1x16xf32>
    %110 = arith.maximumf %108, %109 : vector<1x16xf32>
    %c5 = arith.constant 5 : index
    %c0_61 = arith.constant 0 : index
    %c0_62 = arith.constant 0 : index
    %111 = vector.load %arg5[%c5, %c0_61, %c0_62] : memref<9x16x84xf32, #tpu.memory_space<vmem>>, vector<1x16x84xf32>
    %112 = vector.shape_cast %111 : vector<1x16x84xf32> to vector<16x84xf32>
    %cst_63 = arith.constant dense<0.000000e+00> : vector<1x84xf32>
    %113 = tpu.matmul %110, %112, %cst_63 {dimension_numbers = #tpu.dot_dimension_numbers<[1], [0], [0], [1], [0, 0, 1, 1], [], []>} : vector<1x16xf32>, vector<16x84xf32>, vector<1x84xf32> -> vector<1x84xf32>
    %114 = arith.addf %107, %113 : vector<1x84xf32>
    %115 = vector.extract_strided_slice %61 {offsets = [4, 0, 0], sizes = [1, 8, 16], strides = [1, 1, 1]} : vector<6x8x16xf32> to vector<1x8x16xf32>
    %116 = vector.shape_cast %115 : vector<1x8x16xf32> to vector<8x16xf32>
    %117 = vector.extract_strided_slice %61 {offsets = [5, 0, 0], sizes = [1, 8, 16], strides = [1, 1, 1]} : vector<6x8x16xf32> to vector<1x8x16xf32>
    %118 = vector.shape_cast %117 : vector<1x8x16xf32> to vector<8x16xf32>
    %119 = arith.maximumf %116, %118 : vector<8x16xf32>
    %120 = vector.extract_strided_slice %119 {offsets = [0, 0], sizes = [1, 16], strides = [1, 1]} : vector<8x16xf32> to vector<1x16xf32>
    %121 = vector.extract_strided_slice %119 {offsets = [1, 0], sizes = [1, 16], strides = [1, 1]} : vector<8x16xf32> to vector<1x16xf32>
    %122 = arith.maximumf %120, %121 : vector<1x16xf32>
    %c6 = arith.constant 6 : index
    %c0_64 = arith.constant 0 : index
    %c0_65 = arith.constant 0 : index
    %123 = vector.load %arg5[%c6, %c0_64, %c0_65] : memref<9x16x84xf32, #tpu.memory_space<vmem>>, vector<1x16x84xf32>
    %124 = vector.shape_cast %123 : vector<1x16x84xf32> to vector<16x84xf32>
    %cst_66 = arith.constant dense<0.000000e+00> : vector<1x84xf32>
    %125 = tpu.matmul %122, %124, %cst_66 {dimension_numbers = #tpu.dot_dimension_numbers<[1], [0], [0], [1], [0, 0, 1, 1], [], []>} : vector<1x16xf32>, vector<16x84xf32>, vector<1x84xf32> -> vector<1x84xf32>
    %126 = arith.addf %114, %125 : vector<1x84xf32>
    %127 = vector.extract_strided_slice %119 {offsets = [2, 0], sizes = [1, 16], strides = [1, 1]} : vector<8x16xf32> to vector<1x16xf32>
    %128 = vector.extract_strided_slice %119 {offsets = [3, 0], sizes = [1, 16], strides = [1, 1]} : vector<8x16xf32> to vector<1x16xf32>
    %129 = arith.maximumf %127, %128 : vector<1x16xf32>
    %c7 = arith.constant 7 : index
    %c0_67 = arith.constant 0 : index
    %c0_68 = arith.constant 0 : index
    %130 = vector.load %arg5[%c7, %c0_67, %c0_68] : memref<9x16x84xf32, #tpu.memory_space<vmem>>, vector<1x16x84xf32>
    %131 = vector.shape_cast %130 : vector<1x16x84xf32> to vector<16x84xf32>
    %cst_69 = arith.constant dense<0.000000e+00> : vector<1x84xf32>
    %132 = tpu.matmul %129, %131, %cst_69 {dimension_numbers = #tpu.dot_dimension_numbers<[1], [0], [0], [1], [0, 0, 1, 1], [], []>} : vector<1x16xf32>, vector<16x84xf32>, vector<1x84xf32> -> vector<1x84xf32>
    %133 = arith.addf %126, %132 : vector<1x84xf32>
    %134 = vector.extract_strided_slice %119 {offsets = [4, 0], sizes = [1, 16], strides = [1, 1]} : vector<8x16xf32> to vector<1x16xf32>
    %135 = vector.extract_strided_slice %119 {offsets = [5, 0], sizes = [1, 16], strides = [1, 1]} : vector<8x16xf32> to vector<1x16xf32>
    %136 = arith.maximumf %134, %135 : vector<1x16xf32>
    %c8 = arith.constant 8 : index
    %c0_70 = arith.constant 0 : index
    %c0_71 = arith.constant 0 : index
    %137 = vector.load %arg5[%c8, %c0_70, %c0_71] : memref<9x16x84xf32, #tpu.memory_space<vmem>>, vector<1x16x84xf32>
    %138 = vector.shape_cast %137 : vector<1x16x84xf32> to vector<16x84xf32>
    %cst_72 = arith.constant dense<0.000000e+00> : vector<1x84xf32>
    %139 = tpu.matmul %136, %138, %cst_72 {dimension_numbers = #tpu.dot_dimension_numbers<[1], [0], [0], [1], [0, 0, 1, 1], [], []>} : vector<1x16xf32>, vector<16x84xf32>, vector<1x84xf32> -> vector<1x84xf32>
    %140 = arith.addf %133, %139 : vector<1x84xf32>
    %cst_73 = arith.constant 0.000000e+00 : f32
    %141 = vector.broadcast %cst_73 : f32 to vector<1x84xf32>
    %142 = arith.maximumf %140, %141 : vector<1x84xf32>
    %c0_74 = arith.constant 0 : index
    %c0_75 = arith.constant 0 : index
    %143 = vector.load %arg7[%c0_74, %c0_75] : memref<2x84xf32, #tpu.memory_space<vmem>>, vector<1x84xf32>
    tpu.vector_store %arg7[%c0_74, %c0_75], %142 {strides = array<i32>} : memref<2x84xf32, #tpu.memory_space<vmem>>, vector<1x84xf32>,
    %c4_76 = arith.constant 4 : index
    %c0_77 = arith.constant 0 : index
    %144 = vector.load %arg0[%c4_76, %c0_77] : memref<8x64xf32, #tpu.memory_space<vmem>>, vector<4x64xf32>
    %c0_78 = arith.constant 0 : index
    %c0_79 = arith.constant 0 : index
    %c0_80 = arith.constant 0 : index
    %145 = vector.load %arg1[%c0_78, %c0_79, %c0_80] : memref<4x4x30xf32, #tpu.memory_space<vmem>>, vector<1x4x30xf32>
    %146 = vector.shape_cast %145 : vector<1x4x30xf32> to vector<4x30xf32>
    %cst_81 = arith.constant dense<0.000000e+00> : vector<64x30xf32>
    %147 = tpu.matmul %144, %146, %cst_81 {dimension_numbers = #tpu.dot_dimension_numbers<[0], [0], [1], [1], [0, 1, 1, 1], [], []>} : vector<4x64xf32>, vector<4x30xf32>, vector<64x30xf32> -> vector<64x30xf32>
    %148 = vector.shape_cast %147 : vector<64x30xf32> to vector<8x8x30xf32>
    %149 = vector.extract_strided_slice %148 {offsets = [0, 0, 0], sizes = [7, 8, 30], strides = [1, 1, 1]} : vector<8x8x30xf32> to vector<7x8x30xf32>
    %c1_82 = arith.constant 1 : index
    %c0_83 = arith.constant 0 : index
    %c0_84 = arith.constant 0 : index
    %150 = vector.load %arg1[%c1_82, %c0_83, %c0_84] : memref<4x4x30xf32, #tpu.memory_space<vmem>>, vector<1x4x30xf32>
    %151 = vector.shape_cast %150 : vector<1x4x30xf32> to vector<4x30xf32>
    %cst_85 = arith.constant dense<0.000000e+00> : vector<64x30xf32>
    %152 = tpu.matmul %144, %151, %cst_85 {dimension_numbers = #tpu.dot_dimension_numbers<[0], [0], [1], [1], [0, 1, 1, 1], [], []>} : vector<4x64xf32>, vector<4x30xf32>, vector<64x30xf32> -> vector<64x30xf32>
    %153 = vector.shape_cast %152 : vector<64x30xf32> to vector<8x8x30xf32>
    %c7_i32_86 = arith.constant 7 : i32
    %154 = tpu.dynamic_rotate %153 by %c7_i32_86 dim 1 : vector<8x8x30xf32>, i32 -> vector<8x8x30xf32>
    %155 = vector.extract_strided_slice %154 {offsets = [0, 0, 0], sizes = [7, 8, 30], strides = [1, 1, 1]} : vector<8x8x30xf32> to vector<7x8x30xf32>
    %156 = arith.addf %149, %155 : vector<7x8x30xf32>
    %c2_87 = arith.constant 2 : index
    %c0_88 = arith.constant 0 : index
    %c0_89 = arith.constant 0 : index
    %157 = vector.load %arg1[%c2_87, %c0_88, %c0_89] : memref<4x4x30xf32, #tpu.memory_space<vmem>>, vector<1x4x30xf32>
    %158 = vector.shape_cast %157 : vector<1x4x30xf32> to vector<4x30xf32>
    %cst_90 = arith.constant dense<0.000000e+00> : vector<64x30xf32>
    %159 = tpu.matmul %144, %158, %cst_90 {dimension_numbers = #tpu.dot_dimension_numbers<[0], [0], [1], [1], [0, 1, 1, 1], [], []>} : vector<4x64xf32>, vector<4x30xf32>, vector<64x30xf32> -> vector<64x30xf32>
    %160 = vector.shape_cast %159 : vector<64x30xf32> to vector<8x8x30xf32>
    %161 = vector.extract_strided_slice %160 {offsets = [1, 0, 0], sizes = [7, 8, 30], strides = [1, 1, 1]} : vector<8x8x30xf32> to vector<7x8x30xf32>
    %162 = arith.addf %156, %161 : vector<7x8x30xf32>
    %c3_91 = arith.constant 3 : index
    %c0_92 = arith.constant 0 : index
    %c0_93 = arith.constant 0 : index
    %163 = vector.load %arg1[%c3_91, %c0_92, %c0_93] : memref<4x4x30xf32, #tpu.memory_space<vmem>>, vector<1x4x30xf32>
    %164 = vector.shape_cast %163 : vector<1x4x30xf32> to vector<4x30xf32>
    %cst_94 = arith.constant dense<0.000000e+00> : vector<64x30xf32>
    %165 = tpu.matmul %144, %164, %cst_94 {dimension_numbers = #tpu.dot_dimension_numbers<[0], [0], [1], [1], [0, 1, 1, 1], [], []>} : vector<4x64xf32>, vector<4x30xf32>, vector<64x30xf32> -> vector<64x30xf32>
    %166 = vector.shape_cast %165 : vector<64x30xf32> to vector<8x8x30xf32>
    %c7_i32_95 = arith.constant 7 : i32
    %167 = tpu.dynamic_rotate %166 by %c7_i32_95 dim 1 : vector<8x8x30xf32>, i32 -> vector<8x8x30xf32>
    %168 = vector.extract_strided_slice %167 {offsets = [1, 0, 0], sizes = [7, 8, 30], strides = [1, 1, 1]} : vector<8x8x30xf32> to vector<7x8x30xf32>
    %169 = arith.addf %162, %168 : vector<7x8x30xf32>
    %c0_96 = arith.constant 0 : index
    %c0_97 = arith.constant 0 : index
    %c0_98 = arith.constant 0 : index
    %170 = vector.load %arg2[%c0_96, %c0_97, %c0_98] : memref<1x1x30xf32, #tpu.memory_space<vmem>>, vector<1x1x30xf32>
    %171 = vector.broadcast %170 : vector<1x1x30xf32> to vector<7x8x30xf32>
    %172 = arith.addf %169, %171 : vector<7x8x30xf32>
    %cst_99 = arith.constant 0.000000e+00 : f32
    %173 = vector.broadcast %cst_99 : f32 to vector<7x8x30xf32>
    %174 = arith.maximumf %172, %173 : vector<7x8x30xf32>
    %175 = vector.shape_cast %174 : vector<7x8x30xf32> to vector<56x30xf32>
    %c0_100 = arith.constant 0 : index
    %c0_101 = arith.constant 0 : index
    %c0_102 = arith.constant 0 : index
    %176 = vector.load %arg3[%c0_100, %c0_101, %c0_102] : memref<4x30x16xf32, #tpu.memory_space<vmem>>, vector<1x30x16xf32>
    %177 = vector.shape_cast %176 : vector<1x30x16xf32> to vector<30x16xf32>
    %cst_103 = arith.constant dense<0.000000e+00> : vector<56x16xf32>
    %178 = tpu.matmul %175, %177, %cst_103 {dimension_numbers = #tpu.dot_dimension_numbers<[1], [0], [0], [1], [0, 0, 1, 1], [], []>} : vector<56x30xf32>, vector<30x16xf32>, vector<56x16xf32> -> vector<56x16xf32>
    %179 = vector.shape_cast %178 : vector<56x16xf32> to vector<7x8x16xf32>
    %180 = vector.extract_strided_slice %179 {offsets = [0, 0, 0], sizes = [6, 8, 16], strides = [1, 1, 1]} : vector<7x8x16xf32> to vector<6x8x16xf32>
    %c1_104 = arith.constant 1 : index
    %c0_105 = arith.constant 0 : index
    %c0_106 = arith.constant 0 : index
    %181 = vector.load %arg3[%c1_104, %c0_105, %c0_106] : memref<4x30x16xf32, #tpu.memory_space<vmem>>, vector<1x30x16xf32>
    %182 = vector.shape_cast %181 : vector<1x30x16xf32> to vector<30x16xf32>
    %cst_107 = arith.constant dense<0.000000e+00> : vector<56x16xf32>
    %183 = tpu.matmul %175, %182, %cst_107 {dimension_numbers = #tpu.dot_dimension_numbers<[1], [0], [0], [1], [0, 0, 1, 1], [], []>} : vector<56x30xf32>, vector<30x16xf32>, vector<56x16xf32> -> vector<56x16xf32>
    %184 = vector.shape_cast %183 : vector<56x16xf32> to vector<7x8x16xf32>
    %c7_i32_108 = arith.constant 7 : i32
    %185 = tpu.dynamic_rotate %184 by %c7_i32_108 dim 1 : vector<7x8x16xf32>, i32 -> vector<7x8x16xf32>
    %186 = vector.extract_strided_slice %185 {offsets = [0, 0, 0], sizes = [6, 8, 16], strides = [1, 1, 1]} : vector<7x8x16xf32> to vector<6x8x16xf32>
    %187 = arith.addf %180, %186 : vector<6x8x16xf32>
    %c2_109 = arith.constant 2 : index
    %c0_110 = arith.constant 0 : index
    %c0_111 = arith.constant 0 : index
    %188 = vector.load %arg3[%c2_109, %c0_110, %c0_111] : memref<4x30x16xf32, #tpu.memory_space<vmem>>, vector<1x30x16xf32>
    %189 = vector.shape_cast %188 : vector<1x30x16xf32> to vector<30x16xf32>
    %cst_112 = arith.constant dense<0.000000e+00> : vector<56x16xf32>
    %190 = tpu.matmul %175, %189, %cst_112 {dimension_numbers = #tpu.dot_dimension_numbers<[1], [0], [0], [1], [0, 0, 1, 1], [], []>} : vector<56x30xf32>, vector<30x16xf32>, vector<56x16xf32> -> vector<56x16xf32>
    %191 = vector.shape_cast %190 : vector<56x16xf32> to vector<7x8x16xf32>
    %192 = vector.extract_strided_slice %191 {offsets = [1, 0, 0], sizes = [6, 8, 16], strides = [1, 1, 1]} : vector<7x8x16xf32> to vector<6x8x16xf32>
    %193 = arith.addf %187, %192 : vector<6x8x16xf32>
    %c3_113 = arith.constant 3 : index
    %c0_114 = arith.constant 0 : index
    %c0_115 = arith.constant 0 : index
    %194 = vector.load %arg3[%c3_113, %c0_114, %c0_115] : memref<4x30x16xf32, #tpu.memory_space<vmem>>, vector<1x30x16xf32>
    %195 = vector.shape_cast %194 : vector<1x30x16xf32> to vector<30x16xf32>
    %cst_116 = arith.constant dense<0.000000e+00> : vector<56x16xf32>
    %196 = tpu.matmul %175, %195, %cst_116 {dimension_numbers = #tpu.dot_dimension_numbers<[1], [0], [0], [1], [0, 0, 1, 1], [], []>} : vector<56x30xf32>, vector<30x16xf32>, vector<56x16xf32> -> vector<56x16xf32>
    %197 = vector.shape_cast %196 : vector<56x16xf32> to vector<7x8x16xf32>
    %c7_i32_117 = arith.constant 7 : i32
    %198 = tpu.dynamic_rotate %197 by %c7_i32_117 dim 1 : vector<7x8x16xf32>, i32 -> vector<7x8x16xf32>
    %199 = vector.extract_strided_slice %198 {offsets = [1, 0, 0], sizes = [6, 8, 16], strides = [1, 1, 1]} : vector<7x8x16xf32> to vector<6x8x16xf32>
    %200 = arith.addf %193, %199 : vector<6x8x16xf32>
    %c0_118 = arith.constant 0 : index
    %c0_119 = arith.constant 0 : index
    %c0_120 = arith.constant 0 : index
    %201 = vector.load %arg4[%c0_118, %c0_119, %c0_120] : memref<1x1x16xf32, #tpu.memory_space<vmem>>, vector<1x1x16xf32>
    %202 = vector.broadcast %201 : vector<1x1x16xf32> to vector<6x8x16xf32>
    %203 = arith.addf %200, %202 : vector<6x8x16xf32>
    %cst_121 = arith.constant 0.000000e+00 : f32
    %204 = vector.broadcast %cst_121 : f32 to vector<6x8x16xf32>
    %205 = arith.maximumf %203, %204 : vector<6x8x16xf32>
    %c0_122 = arith.constant 0 : index
    %c0_123 = arith.constant 0 : index
    %206 = vector.load %arg6[%c0_122, %c0_123] : memref<1x84xf32, #tpu.memory_space<vmem>>, vector<1x84xf32>
    %207 = vector.extract_strided_slice %205 {offsets = [0, 0, 0], sizes = [1, 8, 16], strides = [1, 1, 1]} : vector<6x8x16xf32> to vector<1x8x16xf32>
    %208 = vector.shape_cast %207 : vector<1x8x16xf32> to vector<8x16xf32>
    %209 = vector.extract_strided_slice %205 {offsets = [1, 0, 0], sizes = [1, 8, 16], strides = [1, 1, 1]} : vector<6x8x16xf32> to vector<1x8x16xf32>
    %210 = vector.shape_cast %209 : vector<1x8x16xf32> to vector<8x16xf32>
    %211 = arith.maximumf %208, %210 : vector<8x16xf32>
    %212 = vector.extract_strided_slice %211 {offsets = [0, 0], sizes = [1, 16], strides = [1, 1]} : vector<8x16xf32> to vector<1x16xf32>
    %213 = vector.extract_strided_slice %211 {offsets = [1, 0], sizes = [1, 16], strides = [1, 1]} : vector<8x16xf32> to vector<1x16xf32>
    %214 = arith.maximumf %212, %213 : vector<1x16xf32>
    %c0_124 = arith.constant 0 : index
    %c0_125 = arith.constant 0 : index
    %c0_126 = arith.constant 0 : index
    %215 = vector.load %arg5[%c0_124, %c0_125, %c0_126] : memref<9x16x84xf32, #tpu.memory_space<vmem>>, vector<1x16x84xf32>
    %216 = vector.shape_cast %215 : vector<1x16x84xf32> to vector<16x84xf32>
    %cst_127 = arith.constant dense<0.000000e+00> : vector<1x84xf32>
    %217 = tpu.matmul %214, %216, %cst_127 {dimension_numbers = #tpu.dot_dimension_numbers<[1], [0], [0], [1], [0, 0, 1, 1], [], []>} : vector<1x16xf32>, vector<16x84xf32>, vector<1x84xf32> -> vector<1x84xf32>
    %218 = arith.addf %206, %217 : vector<1x84xf32>
    %219 = vector.extract_strided_slice %211 {offsets = [2, 0], sizes = [1, 16], strides = [1, 1]} : vector<8x16xf32> to vector<1x16xf32>
    %220 = vector.extract_strided_slice %211 {offsets = [3, 0], sizes = [1, 16], strides = [1, 1]} : vector<8x16xf32> to vector<1x16xf32>
    %221 = arith.maximumf %219, %220 : vector<1x16xf32>
    %c1_128 = arith.constant 1 : index
    %c0_129 = arith.constant 0 : index
    %c0_130 = arith.constant 0 : index
    %222 = vector.load %arg5[%c1_128, %c0_129, %c0_130] : memref<9x16x84xf32, #tpu.memory_space<vmem>>, vector<1x16x84xf32>
    %223 = vector.shape_cast %222 : vector<1x16x84xf32> to vector<16x84xf32>
    %cst_131 = arith.constant dense<0.000000e+00> : vector<1x84xf32>
    %224 = tpu.matmul %221, %223, %cst_131 {dimension_numbers = #tpu.dot_dimension_numbers<[1], [0], [0], [1], [0, 0, 1, 1], [], []>} : vector<1x16xf32>, vector<16x84xf32>, vector<1x84xf32> -> vector<1x84xf32>
    %225 = arith.addf %218, %224 : vector<1x84xf32>
    %226 = vector.extract_strided_slice %211 {offsets = [4, 0], sizes = [1, 16], strides = [1, 1]} : vector<8x16xf32> to vector<1x16xf32>
    %227 = vector.extract_strided_slice %211 {offsets = [5, 0], sizes = [1, 16], strides = [1, 1]} : vector<8x16xf32> to vector<1x16xf32>
    %228 = arith.maximumf %226, %227 : vector<1x16xf32>
    %c2_132 = arith.constant 2 : index
    %c0_133 = arith.constant 0 : index
    %c0_134 = arith.constant 0 : index
    %229 = vector.load %arg5[%c2_132, %c0_133, %c0_134] : memref<9x16x84xf32, #tpu.memory_space<vmem>>, vector<1x16x84xf32>
    %230 = vector.shape_cast %229 : vector<1x16x84xf32> to vector<16x84xf32>
    %cst_135 = arith.constant dense<0.000000e+00> : vector<1x84xf32>
    %231 = tpu.matmul %228, %230, %cst_135 {dimension_numbers = #tpu.dot_dimension_numbers<[1], [0], [0], [1], [0, 0, 1, 1], [], []>} : vector<1x16xf32>, vector<16x84xf32>, vector<1x84xf32> -> vector<1x84xf32>
    %232 = arith.addf %225, %231 : vector<1x84xf32>
    %233 = vector.extract_strided_slice %205 {offsets = [2, 0, 0], sizes = [1, 8, 16], strides = [1, 1, 1]} : vector<6x8x16xf32> to vector<1x8x16xf32>
    %234 = vector.shape_cast %233 : vector<1x8x16xf32> to vector<8x16xf32>
    %235 = vector.extract_strided_slice %205 {offsets = [3, 0, 0], sizes = [1, 8, 16], strides = [1, 1, 1]} : vector<6x8x16xf32> to vector<1x8x16xf32>
    %236 = vector.shape_cast %235 : vector<1x8x16xf32> to vector<8x16xf32>
    %237 = arith.maximumf %234, %236 : vector<8x16xf32>
    %238 = vector.extract_strided_slice %237 {offsets = [0, 0], sizes = [1, 16], strides = [1, 1]} : vector<8x16xf32> to vector<1x16xf32>
    %239 = vector.extract_strided_slice %237 {offsets = [1, 0], sizes = [1, 16], strides = [1, 1]} : vector<8x16xf32> to vector<1x16xf32>
    %240 = arith.maximumf %238, %239 : vector<1x16xf32>
    %c3_136 = arith.constant 3 : index
    %c0_137 = arith.constant 0 : index
    %c0_138 = arith.constant 0 : index
    %241 = vector.load %arg5[%c3_136, %c0_137, %c0_138] : memref<9x16x84xf32, #tpu.memory_space<vmem>>, vector<1x16x84xf32>
    %242 = vector.shape_cast %241 : vector<1x16x84xf32> to vector<16x84xf32>
    %cst_139 = arith.constant dense<0.000000e+00> : vector<1x84xf32>
    %243 = tpu.matmul %240, %242, %cst_139 {dimension_numbers = #tpu.dot_dimension_numbers<[1], [0], [0], [1], [0, 0, 1, 1], [], []>} : vector<1x16xf32>, vector<16x84xf32>, vector<1x84xf32> -> vector<1x84xf32>
    %244 = arith.addf %232, %243 : vector<1x84xf32>
    %245 = vector.extract_strided_slice %237 {offsets = [2, 0], sizes = [1, 16], strides = [1, 1]} : vector<8x16xf32> to vector<1x16xf32>
    %246 = vector.extract_strided_slice %237 {offsets = [3, 0], sizes = [1, 16], strides = [1, 1]} : vector<8x16xf32> to vector<1x16xf32>
    %247 = arith.maximumf %245, %246 : vector<1x16xf32>
    %c4_140 = arith.constant 4 : index
    %c0_141 = arith.constant 0 : index
    %c0_142 = arith.constant 0 : index
    %248 = vector.load %arg5[%c4_140, %c0_141, %c0_142] : memref<9x16x84xf32, #tpu.memory_space<vmem>>, vector<1x16x84xf32>
    %249 = vector.shape_cast %248 : vector<1x16x84xf32> to vector<16x84xf32>
    %cst_143 = arith.constant dense<0.000000e+00> : vector<1x84xf32>
    %250 = tpu.matmul %247, %249, %cst_143 {dimension_numbers = #tpu.dot_dimension_numbers<[1], [0], [0], [1], [0, 0, 1, 1], [], []>} : vector<1x16xf32>, vector<16x84xf32>, vector<1x84xf32> -> vector<1x84xf32>
    %251 = arith.addf %244, %250 : vector<1x84xf32>
    %252 = vector.extract_strided_slice %237 {offsets = [4, 0], sizes = [1, 16], strides = [1, 1]} : vector<8x16xf32> to vector<1x16xf32>
    %253 = vector.extract_strided_slice %237 {offsets = [5, 0], sizes = [1, 16], strides = [1, 1]} : vector<8x16xf32> to vector<1x16xf32>
    %254 = arith.maximumf %252, %253 : vector<1x16xf32>
    %c5_144 = arith.constant 5 : index
    %c0_145 = arith.constant 0 : index
    %c0_146 = arith.constant 0 : index
    %255 = vector.load %arg5[%c5_144, %c0_145, %c0_146] : memref<9x16x84xf32, #tpu.memory_space<vmem>>, vector<1x16x84xf32>
    %256 = vector.shape_cast %255 : vector<1x16x84xf32> to vector<16x84xf32>
    %cst_147 = arith.constant dense<0.000000e+00> : vector<1x84xf32>
    %257 = tpu.matmul %254, %256, %cst_147 {dimension_numbers = #tpu.dot_dimension_numbers<[1], [0], [0], [1], [0, 0, 1, 1], [], []>} : vector<1x16xf32>, vector<16x84xf32>, vector<1x84xf32> -> vector<1x84xf32>
    %258 = arith.addf %251, %257 : vector<1x84xf32>
    %259 = vector.extract_strided_slice %205 {offsets = [4, 0, 0], sizes = [1, 8, 16], strides = [1, 1, 1]} : vector<6x8x16xf32> to vector<1x8x16xf32>
    %260 = vector.shape_cast %259 : vector<1x8x16xf32> to vector<8x16xf32>
    %261 = vector.extract_strided_slice %205 {offsets = [5, 0, 0], sizes = [1, 8, 16], strides = [1, 1, 1]} : vector<6x8x16xf32> to vector<1x8x16xf32>
    %262 = vector.shape_cast %261 : vector<1x8x16xf32> to vector<8x16xf32>
    %263 = arith.maximumf %260, %262 : vector<8x16xf32>
    %264 = vector.extract_strided_slice %263 {offsets = [0, 0], sizes = [1, 16], strides = [1, 1]} : vector<8x16xf32> to vector<1x16xf32>
    %265 = vector.extract_strided_slice %263 {offsets = [1, 0], sizes = [1, 16], strides = [1, 1]} : vector<8x16xf32> to vector<1x16xf32>
    %266 = arith.maximumf %264, %265 : vector<1x16xf32>
    %c6_148 = arith.constant 6 : index
    %c0_149 = arith.constant 0 : index
    %c0_150 = arith.constant 0 : index
    %267 = vector.load %arg5[%c6_148, %c0_149, %c0_150] : memref<9x16x84xf32, #tpu.memory_space<vmem>>, vector<1x16x84xf32>
    %268 = vector.shape_cast %267 : vector<1x16x84xf32> to vector<16x84xf32>
    %cst_151 = arith.constant dense<0.000000e+00> : vector<1x84xf32>
    %269 = tpu.matmul %266, %268, %cst_151 {dimension_numbers = #tpu.dot_dimension_numbers<[1], [0], [0], [1], [0, 0, 1, 1], [], []>} : vector<1x16xf32>, vector<16x84xf32>, vector<1x84xf32> -> vector<1x84xf32>
    %270 = arith.addf %258, %269 : vector<1x84xf32>
    %271 = vector.extract_strided_slice %263 {offsets = [2, 0], sizes = [1, 16], strides = [1, 1]} : vector<8x16xf32> to vector<1x16xf32>
    %272 = vector.extract_strided_slice %263 {offsets = [3, 0], sizes = [1, 16], strides = [1, 1]} : vector<8x16xf32> to vector<1x16xf32>
    %273 = arith.maximumf %271, %272 : vector<1x16xf32>
    %c7_152 = arith.constant 7 : index
    %c0_153 = arith.constant 0 : index
    %c0_154 = arith.constant 0 : index
    %274 = vector.load %arg5[%c7_152, %c0_153, %c0_154] : memref<9x16x84xf32, #tpu.memory_space<vmem>>, vector<1x16x84xf32>
    %275 = vector.shape_cast %274 : vector<1x16x84xf32> to vector<16x84xf32>
    %cst_155 = arith.constant dense<0.000000e+00> : vector<1x84xf32>
    %276 = tpu.matmul %273, %275, %cst_155 {dimension_numbers = #tpu.dot_dimension_numbers<[1], [0], [0], [1], [0, 0, 1, 1], [], []>} : vector<1x16xf32>, vector<16x84xf32>, vector<1x84xf32> -> vector<1x84xf32>
    %277 = arith.addf %270, %276 : vector<1x84xf32>
    %278 = vector.extract_strided_slice %263 {offsets = [4, 0], sizes = [1, 16], strides = [1, 1]} : vector<8x16xf32> to vector<1x16xf32>
    %279 = vector.extract_strided_slice %263 {offsets = [5, 0], sizes = [1, 16], strides = [1, 1]} : vector<8x16xf32> to vector<1x16xf32>
    %280 = arith.maximumf %278, %279 : vector<1x16xf32>
    %c8_156 = arith.constant 8 : index
    %c0_157 = arith.constant 0 : index
    %c0_158 = arith.constant 0 : index
    %281 = vector.load %arg5[%c8_156, %c0_157, %c0_158] : memref<9x16x84xf32, #tpu.memory_space<vmem>>, vector<1x16x84xf32>
    %282 = vector.shape_cast %281 : vector<1x16x84xf32> to vector<16x84xf32>
    %cst_159 = arith.constant dense<0.000000e+00> : vector<1x84xf32>
    %283 = tpu.matmul %280, %282, %cst_159 {dimension_numbers = #tpu.dot_dimension_numbers<[1], [0], [0], [1], [0, 0, 1, 1], [], []>} : vector<1x16xf32>, vector<16x84xf32>, vector<1x84xf32> -> vector<1x84xf32>
    %284 = arith.addf %277, %283 : vector<1x84xf32>
    %cst_160 = arith.constant 0.000000e+00 : f32
    %285 = vector.broadcast %cst_160 : f32 to vector<1x84xf32>
    %286 = arith.maximumf %284, %285 : vector<1x84xf32>
    %c1_161 = arith.constant 1 : index
    %c0_162 = arith.constant 0 : index
    %287 = vector.load %arg7[%c1_161, %c0_162] : memref<2x84xf32, #tpu.memory_space<vmem>>, vector<1x84xf32>
    tpu.vector_store %arg7[%c1_161, %c0_162], %286 {strides = array<i32>} : memref<2x84xf32, #tpu.memory_space<vmem>>, vector<1x84xf32>,
    return
  }
}

</mosaic_0001>

<llo_original>
// kernel: net_forward.1
$region0: #{net_forward.1}
  #allocation0 [shape = 'u32[]', space=smem, size = 0x4, offset = 0x4, fixed_abs, tag = 'smem constant byte address 0x4 - core index']
  #allocation1 [shape = 'u32[72,128]{1,0:T(1,128)}', space=vmem, size = 0x9000, scoped, tag = 'internal scratch']
  %s0 = inlined_call_operand.vmem [shape: f32[8,64], index: 0, kind: input, shape index: {}]
  %s1 = inlined_call_operand.vmem [shape: f32[4,4,30], index: 1, kind: input, shape index: {}]
  %s2 = inlined_call_operand.vmem [shape: f32[1,1,30], index: 2, kind: input, shape index: {}]
  %s3 = inlined_call_operand.vmem [shape: f32[4,30,16], index: 3, kind: input, shape index: {}]
  %s4 = inlined_call_operand.vmem [shape: f32[1,1,16], index: 4, kind: input, shape index: {}]
  %s5 = inlined_call_operand.vmem [shape: f32[9,16,84], index: 5, kind: input, shape index: {}]
  %s6 = inlined_call_operand.vmem [shape: f32[1,84], index: 6, kind: input, shape index: {}]
  %s7 = inlined_call_operand.hbm [shape: f32[2,84], index: 7, kind: output, shape index: {}]
  %s8 = sld [smem:[#allocation0]]
  $region38: #{net_forward.1} parent=0
    _
  %s10 = ssub.s32 1, %s8
  %s11 = scalar_select 0, %s10, %s8
  $region1: #{net_forward.1} parent=0
    #allocation2 [shape = 'u8[1024]{0}', space=vmem, size = 0x400, scoped, tag = 'output window, operand 0, single buffered']
    #allocation3 [shape = 's32[1]{0}', space=sflag, size = 0x4, scoped, tag = 'scoped memory for net_forward.1']
    %12 = vsyncpa [#allocation3], 0
    // Predicated region
    $region2: #{net_forward.1} parent=1 // pred_check
      _
    $region3: #{net_forward.1} parent=1 // pred_check_branch
      %14 = sbr.rel (0) target = $region5
    $region4: #{net_forward.1} parent=1 // pred_region
      _
    $region5: #{net_forward.1} parent=1 // pred_fallthru
      _
    // Predicated region
    $region6: #{net_forward.1} parent=1 // pred_check
      _
    $region7: #{net_forward.1} parent=1 // pred_check_branch
      %16 = sbr.rel (0) target = $region9
    $region8: #{net_forward.1} parent=1 // pred_region
      _
    $region9: #{net_forward.1} parent=1 // pred_fallthru
      _
    // Predicated region
    $region10: #{net_forward.1} parent=1 // pred_check
      _
    $region11: #{net_forward.1} parent=1 // pred_check_branch
      %18 = sbr.rel (0) target = $region13
    $region12: #{net_forward.1} parent=1 // pred_region
      _
    $region13: #{net_forward.1} parent=1 // pred_fallthru
      _
    // Predicated region
    $region14: #{net_forward.1} parent=1 // pred_check
      _
    $region15: #{net_forward.1} parent=1 // pred_check_branch
      %20 = sbr.rel (0) target = $region17
    $region16: #{net_forward.1} parent=1 // pred_region
      _
    $region17: #{net_forward.1} parent=1 // pred_fallthru
      _
    // Predicated region
    $region18: #{net_forward.1} parent=1 // pred_check
      _
    $region19: #{net_forward.1} parent=1 // pred_check_branch
      %22 = sbr.rel (0) target = $region21
    $region20: #{net_forward.1} parent=1 // pred_region
      _
    $region21: #{net_forward.1} parent=1 // pred_fallthru
      _
    // Predicated region
    $region22: #{net_forward.1} parent=1 // pred_check
      _
    $region23: #{net_forward.1} parent=1 // pred_check_branch
      %24 = sbr.rel (0) target = $region25
    $region24: #{net_forward.1} parent=1 // pred_region
      _
    $region25: #{net_forward.1} parent=1 // pred_fallthru
      _
    // Predicated region
    $region26: #{net_forward.1} parent=1 // pred_check
      _
    $region27: #{net_forward.1} parent=1 // pred_check_branch
      %26 = sbr.rel (0) target = $region29
    $region28: #{net_forward.1} parent=1 // pred_region
      _
    $region29: #{net_forward.1} parent=1 // pred_fallthru
      _
    %v27 = vld [vmem:[%s0] sm:$0xf]
    %v28 = vld [vmem:[%s1] sm:$0xf]
    %29 = vxpose.xlu0.b32.start [1/16] %v27, 128
    %30 = vxpose.xlu0.b32.cont [2/16] 0.0, 128
    %31 = vxpose.xlu0.b32.cont [3/16] 0.0, 128
    %32 = vxpose.xlu0.b32.cont [4/16] 0.0, 128
    %33 = vxpose.xlu0.b32.cont [5/16] 0.0, 128
    %34 = vxpose.xlu0.b32.cont [6/16] 0.0, 128
    %35 = vxpose.xlu0.b32.cont [7/16] 0.0, 128
    %36 = vxpose.xlu0.b32.cont [8/16] 0.0, 128
    %37 = vxpose.xlu0.b32.cont [9/16] 0.0, 128
    %38 = vxpose.xlu0.b32.cont [10/16] 0.0, 128
    %39 = vxpose.xlu0.b32.cont [11/16] 0.0, 128
    %40 = vxpose.xlu0.b32.cont [12/16] 0.0, 128
    %41 = vxpose.xlu0.b32.cont [13/16] 0.0, 128
    %42 = vxpose.xlu0.b32.cont [14/16] 0.0, 128
    %43 = vxpose.xlu0.b32.cont [15/16] 0.0, 128
    %44 = vxpose.xlu0.b32.end [16/16] 0.0, 128
    %v45 = vpop.trf.xlu0
    %v46 = vpop.trf.xlu0
    %v47 = vpop.trf.xlu0
    %v48 = vpop.trf.xlu0
    %v49 = vpop.trf.xlu0
    %v50 = vpop.trf.xlu0
    %v51 = vpop.trf.xlu0
    %v52 = vpop.trf.xlu0
    %v53 = vpop.trf.xlu0
    %v54 = vpop.trf.xlu0
    %v55 = vpop.trf.xlu0
    %v56 = vpop.trf.xlu0
    %v57 = vpop.trf.xlu0
    %v58 = vpop.trf.xlu0
    %v59 = vpop.trf.xlu0
    %v60 = vpop.trf.xlu0
    %vm61 = vcmask 31744
    %v63 = vsel %vm61, %v45, 0
    %v66 = vsel %vm61, %v46, 0
    %v69 = vsel %vm61, %v47, 0
    %v72 = vsel %vm61, %v48, 0
    %v75 = vsel %vm61, %v49, 0
    %v78 = vsel %vm61, %v50, 0
    %v81 = vsel %vm61, %v51, 0
    %v84 = vsel %vm61, %v52, 0
    %vm86 = vcmask 1043456
    %v88 = vsel %vm86, %v28, 0
    %90 = vmatpush.msra.mxu0 0.0
    %91 = vmatpush.msra.mxu0 0.0
    %92 = vmatpush.msra.mxu0 0.0
    %93 = vmatpush.msra.mxu0 0.0
    %94 = vmatpush.msra.mxu0 0.0
    %95 = vmatpush.msra.mxu0 0.0
    %96 = vmatpush.msra.mxu0 0.0
    %97 = vmatpush.msra.mxu0 0.0
    %98 = vmatpush.msra.mxu0 0.0
    %99 = vmatpush.msra.mxu0 0.0
    %100 = vmatpush.msra.mxu0 0.0
    %101 = vmatpush.msra.mxu0 0.0
    %102 = vmatpush.msra.mxu0 0.0
    %103 = vmatpush.msra.mxu0 0.0
    %104 = vmatpush.msra.mxu0 0.0
    %105 = vmatpush.msra.mxu0 %v88
    %106 = vmatmul.f32.gmra.mxu0 %v63
    %v107 = vpop.f32.mrf.mxu0
    %v108 = vadd.f32 0.0, %v107
    %109 = vmatmul.f32.gmra.mxu0 %v66
    %v110 = vpop.f32.mrf.mxu0
    %v111 = vadd.f32 0.0, %v110
    %112 = vmatmul.f32.gmra.mxu0 %v69
    %v113 = vpop.f32.mrf.mxu0
    %v114 = vadd.f32 0.0, %v113
    %115 = vmatmul.f32.gmra.mxu0 %v72
    %v116 = vpop.f32.mrf.mxu0
    %v117 = vadd.f32 0.0, %v116
    %118 = vmatmul.f32.gmra.mxu0 %v75
    %v119 = vpop.f32.mrf.mxu0
    %v120 = vadd.f32 0.0, %v119
    %121 = vmatmul.f32.gmra.mxu0 %v78
    %v122 = vpop.f32.mrf.mxu0
    %v123 = vadd.f32 0.0, %v122
    %124 = vmatmul.f32.gmra.mxu0 %v81
    %v125 = vpop.f32.mrf.mxu0
    %v126 = vadd.f32 0.0, %v125
    %127 = vmatmul.f32.gmra.mxu0 %v84
    %v128 = vpop.f32.mrf.mxu0
    %129 = vdwg.mxu0
    %s130 = scalar_lea.vmem %s1, 4
    %v131 = vld [vmem:[%s130] sm:$0xf]
    %v133 = vsel %vm86, %v131, 0
    %135 = vmatpush.msra.mxu0 0.0
    %136 = vmatpush.msra.mxu0 0.0
    %137 = vmatpush.msra.mxu0 0.0
    %138 = vmatpush.msra.mxu0 0.0
    %139 = vmatpush.msra.mxu0 0.0
    %140 = vmatpush.msra.mxu0 0.0
    %141 = vmatpush.msra.mxu0 0.0
    %142 = vmatpush.msra.mxu0 0.0
    %143 = vmatpush.msra.mxu0 0.0
    %144 = vmatpush.msra.mxu0 0.0
    %145 = vmatpush.msra.mxu0 0.0
    %146 = vmatpush.msra.mxu0 0.0
    %147 = vmatpush.msra.mxu0 0.0
    %148 = vmatpush.msra.mxu0 0.0
    %149 = vmatpush.msra.mxu0 0.0
    %150 = vmatpush.msra.mxu0 %v133
    %151 = vmatmul.f32.gmra.mxu0 %v63
    %v152 = vpop.f32.mrf.mxu0
    %v153 = vadd.f32 0.0, %v152
    %154 = vmatmul.f32.gmra.mxu0 %v66
    %v155 = vpop.f32.mrf.mxu0
    %v156 = vadd.f32 0.0, %v155
    %157 = vmatmul.f32.gmra.mxu0 %v69
    %v158 = vpop.f32.mrf.mxu0
    %v159 = vadd.f32 0.0, %v158
    %160 = vmatmul.f32.gmra.mxu0 %v72
    %v161 = vpop.f32.mrf.mxu0
    %v162 = vadd.f32 0.0, %v161
    %163 = vmatmul.f32.gmra.mxu0 %v75
    %v164 = vpop.f32.mrf.mxu0
    %v165 = vadd.f32 0.0, %v164
    %166 = vmatmul.f32.gmra.mxu0 %v78
    %v167 = vpop.f32.mrf.mxu0
    %v168 = vadd.f32 0.0, %v167
    %169 = vmatmul.f32.gmra.mxu0 %v81
    %v170 = vpop.f32.mrf.mxu0
    %v171 = vadd.f32 0.0, %v170
    %172 = vmatmul.f32.gmra.mxu0 %v84
    %v173 = vpop.f32.mrf.mxu0
    %174 = vdwg.mxu0
    %v175 = vrot.slane %v153, 1
    %v176 = vrot.slane %v156, 1
    %v177 = vrot.slane %v159, 1
    %v178 = vrot.slane %v162, 1
    %v179 = vrot.slane %v165, 1
    %v180 = vrot.slane %v168, 1
    %v181 = vrot.slane %v171, 1
    %v182 = vadd.f32 %v108, %v175
    %v183 = vadd.f32 %v111, %v176
    %v184 = vadd.f32 %v114, %v177
    %v185 = vadd.f32 %v117, %v178
    %v186 = vadd.f32 %v120, %v179
    %v187 = vadd.f32 %v123, %v180
    %v188 = vadd.f32 %v126, %v181
    %s189 = scalar_lea.vmem %s1, 8
    %v190 = vld [vmem:[%s189] sm:$0xf]
    %v192 = vsel %vm86, %v190, 0
    %194 = vmatpush.msra.mxu0 0.0
    %195 = vmatpush.msra.mxu0 0.0
    %196 = vmatpush.msra.mxu0 0.0
    %197 = vmatpush.msra.mxu0 0.0
    %198 = vmatpush.msra.mxu0 0.0
    %199 = vmatpush.msra.mxu0 0.0
    %200 = vmatpush.msra.mxu0 0.0
    %201 = vmatpush.msra.mxu0 0.0
    %202 = vmatpush.msra.mxu0 0.0
    %203 = vmatpush.msra.mxu0 0.0
    %204 = vmatpush.msra.mxu0 0.0
    %205 = vmatpush.msra.mxu0 0.0
    %206 = vmatpush.msra.mxu0 0.0
    %207 = vmatpush.msra.mxu0 0.0
    %208 = vmatpush.msra.mxu0 0.0
    %209 = vmatpush.msra.mxu0 %v192
    %210 = vmatmul.f32.gmra.mxu0 %v63
    %v211 = vpop.f32.mrf.mxu0
    %212 = vmatmul.f32.gmra.mxu0 %v66
    %v213 = vpop.f32.mrf.mxu0
    %v214 = vadd.f32 0.0, %v213
    %215 = vmatmul.f32.gmra.mxu0 %v69
    %v216 = vpop.f32.mrf.mxu0
    %v217 = vadd.f32 0.0, %v216
    %218 = vmatmul.f32.gmra.mxu0 %v72
    %v219 = vpop.f32.mrf.mxu0
    %v220 = vadd.f32 0.0, %v219
    %221 = vmatmul.f32.gmra.mxu0 %v75
    %v222 = vpop.f32.mrf.mxu0
    %v223 = vadd.f32 0.0, %v222
    %224 = vmatmul.f32.gmra.mxu0 %v78
    %v225 = vpop.f32.mrf.mxu0
    %v226 = vadd.f32 0.0, %v225
    %227 = vmatmul.f32.gmra.mxu0 %v81
    %v228 = vpop.f32.mrf.mxu0
    %v229 = vadd.f32 0.0, %v228
    %230 = vmatmul.f32.gmra.mxu0 %v84
    %v231 = vpop.f32.mrf.mxu0
    %v232 = vadd.f32 0.0, %v231
    %233 = vdwg.mxu0
    %v234 = vadd.f32 %v182, %v214
    %v235 = vadd.f32 %v183, %v217
    %v236 = vadd.f32 %v184, %v220
    %v237 = vadd.f32 %v185, %v223
    %v238 = vadd.f32 %v186, %v226
    %v239 = vadd.f32 %v187, %v229
    %v240 = vadd.f32 %v188, %v232
    %s241 = scalar_lea.vmem %s1, 12
    %v242 = vld [vmem:[%s241] sm:$0xf]
    %v244 = vsel %vm86, %v242, 0
    %246 = vmatpush.msra.mxu0 0.0
    %247 = vmatpush.msra.mxu0 0.0
    %248 = vmatpush.msra.mxu0 0.0
    %249 = vmatpush.msra.mxu0 0.0
    %250 = vmatpush.msra.mxu0 0.0
    %251 = vmatpush.msra.mxu0 0.0
    %252 = vmatpush.msra.mxu0 0.0
    %253 = vmatpush.msra.mxu0 0.0
    %254 = vmatpush.msra.mxu0 0.0
    %255 = vmatpush.msra.mxu0 0.0
    %256 = vmatpush.msra.mxu0 0.0
    %257 = vmatpush.msra.mxu0 0.0
    %258 = vmatpush.msra.mxu0 0.0
    %259 = vmatpush.msra.mxu0 0.0
    %260 = vmatpush.msra.mxu0 0.0
    %261 = vmatpush.msra.mxu0 %v244
    %262 = vmatmul.f32.gmra.mxu0 %v63
    %v263 = vpop.f32.mrf.mxu0
    %264 = vmatmul.f32.gmra.mxu0 %v66
    %v265 = vpop.f32.mrf.mxu0
    %v266 = vadd.f32 0.0, %v265
    %267 = vmatmul.f32.gmra.mxu0 %v69
    %v268 = vpop.f32.mrf.mxu0
    %v269 = vadd.f32 0.0, %v268
    %270 = vmatmul.f32.gmra.mxu0 %v72
    %v271 = vpop.f32.mrf.mxu0
    %v272 = vadd.f32 0.0, %v271
    %273 = vmatmul.f32.gmra.mxu0 %v75
    %v274 = vpop.f32.mrf.mxu0
    %v275 = vadd.f32 0.0, %v274
    %276 = vmatmul.f32.gmra.mxu0 %v78
    %v277 = vpop.f32.mrf.mxu0
    %v278 = vadd.f32 0.0, %v277
    %279 = vmatmul.f32.gmra.mxu0 %v81
    %v280 = vpop.f32.mrf.mxu0
    %v281 = vadd.f32 0.0, %v280
    %282 = vmatmul.f32.gmra.mxu0 %v84
    %v283 = vpop.f32.mrf.mxu0
    %v284 = vadd.f32 0.0, %v283
    %285 = vdwg.mxu0
    %v286 = vrot.slane %v266, 1
    %v287 = vrot.slane %v269, 1
    %v288 = vrot.slane %v272, 1
    %v289 = vrot.slane %v275, 1
    %v290 = vrot.slane %v278, 1
    %v291 = vrot.slane %v281, 1
    %v292 = vrot.slane %v284, 1
    %v293 = vadd.f32 %v234, %v286
    %v294 = vadd.f32 %v235, %v287
    %v295 = vadd.f32 %v236, %v288
    %v296 = vadd.f32 %v237, %v289
    %v297 = vadd.f32 %v238, %v290
    %v298 = vadd.f32 %v239, %v291
    %v299 = vadd.f32 %v240, %v292
    %v300 = vld [vmem:[%s2] sm:$0x1]
    %v302 = vperm.slane %v300, 0
    %v304 = vadd.f32 %v293, %v302
    %v305 = vadd.f32 %v294, %v302
    %v306 = vadd.f32 %v295, %v302
    %v307 = vadd.f32 %v296, %v302
    %v308 = vadd.f32 %v297, %v302
    %v309 = vadd.f32 %v298, %v302
    %v310 = vadd.f32 %v299, %v302
    %v311 = vmax.f32 %v304, 0.0
    %v312 = vmax.f32 %v305, 0.0
    %v313 = vmax.f32 %v306, 0.0
    %v314 = vmax.f32 %v307, 0.0
    %v315 = vmax.f32 %v308, 0.0
    %v316 = vmax.f32 %v309, 0.0
    %v317 = vmax.f32 %v310, 0.0
    %v318 = vld [vmem:[%s3] sm:$0xff]
    %v319 = vld [vmem:[%s3 + $0x8] sm:$0xff]
    %v320 = vld [vmem:[%s3 + $0x10] sm:$0xff]
    %v321 = vld [vmem:[%s3 + $0x18] sm:$0x3f]
    %vm322 = vcmask 244736
    %v324 = vsel %vm322, %v311, 0
    %v327 = vsel %vm322, %v312, 0
    %v330 = vsel %vm322, %v313, 0
    %v333 = vsel %vm322, %v314, 0
    %v336 = vsel %vm322, %v315, 0
    %v339 = vsel %vm322, %v316, 0
    %v342 = vsel %vm322, %v317, 0
    %vm344 = vcmask 1045504
    %v346 = vsel %vm344, %v321, 0
    %348 = vmatpush.msra.mxu0 0.0
    %349 = vmatpush.msra.mxu0 0.0
    %350 = vmatpush.msra.mxu0 0.0
    %351 = vmatpush.msra.mxu0 0.0
    %352 = vmatpush.msra.mxu0 0.0
    %353 = vmatpush.msra.mxu0 0.0
    %354 = vmatpush.msra.mxu0 0.0
    %355 = vmatpush.msra.mxu0 0.0
    %356 = vmatpush.msra.mxu0 0.0
    %357 = vmatpush.msra.mxu0 0.0
    %358 = vmatpush.msra.mxu0 0.0
    %359 = vmatpush.msra.mxu0 0.0
    %360 = vmatpush.msra.mxu0 %v346
    %361 = vmatpush.msra.mxu0 %v320
    %362 = vmatpush.msra.mxu0 %v319
    %363 = vmatpush.msra.mxu0 %v318
    %364 = vmatmul.f32.gmra.mxu0 %v324
    %v365 = vpop.f32.mrf.mxu0
    %v366 = vadd.f32 0.0, %v365
    %367 = vmatmul.f32.gmra.mxu0 %v327
    %v368 = vpop.f32.mrf.mxu0
    %v369 = vadd.f32 0.0, %v368
    %370 = vmatmul.f32.gmra.mxu0 %v330
    %v371 = vpop.f32.mrf.mxu0
    %v372 = vadd.f32 0.0, %v371
    %373 = vmatmul.f32.gmra.mxu0 %v333
    %v374 = vpop.f32.mrf.mxu0
    %v375 = vadd.f32 0.0, %v374
    %376 = vmatmul.f32.gmra.mxu0 %v336
    %v377 = vpop.f32.mrf.mxu0
    %v378 = vadd.f32 0.0, %v377
    %379 = vmatmul.f32.gmra.mxu0 %v339
    %v380 = vpop.f32.mrf.mxu0
    %v381 = vadd.f32 0.0, %v380
    %382 = vmatmul.f32.gmra.mxu0 %v342
    %v383 = vpop.f32.mrf.mxu0
    %384 = vdwg.mxu0
    %s385 = scalar_lea.vmem %s3, 32
    %v386 = vld [vmem:[%s385] sm:$0xff]
    %v387 = vld [vmem:[%s385 + $0x8] sm:$0xff]
    %v388 = vld [vmem:[%s385 + $0x10] sm:$0xff]
    %v389 = vld [vmem:[%s385 + $0x18] sm:$0x3f]
    %v391 = vsel %vm344, %v389, 0
    %393 = vmatpush.msra.mxu0 0.0
    %394 = vmatpush.msra.mxu0 0.0
    %395 = vmatpush.msra.mxu0 0.0
    %396 = vmatpush.msra.mxu0 0.0
    %397 = vmatpush.msra.mxu0 0.0
    %398 = vmatpush.msra.mxu0 0.0
    %399 = vmatpush.msra.mxu0 0.0
    %400 = vmatpush.msra.mxu0 0.0
    %401 = vmatpush.msra.mxu0 0.0
    %402 = vmatpush.msra.mxu0 0.0
    %403 = vmatpush.msra.mxu0 0.0
    %404 = vmatpush.msra.mxu0 0.0
    %405 = vmatpush.msra.mxu0 %v391
    %406 = vmatpush.msra.mxu0 %v388
    %407 = vmatpush.msra.mxu0 %v387
    %408 = vmatpush.msra.mxu0 %v386
    %409 = vmatmul.f32.gmra.mxu0 %v324
    %v410 = vpop.f32.mrf.mxu0
    %v411 = vadd.f32 0.0, %v410
    %412 = vmatmul.f32.gmra.mxu0 %v327
    %v413 = vpop.f32.mrf.mxu0
    %v414 = vadd.f32 0.0, %v413
    %415 = vmatmul.f32.gmra.mxu0 %v330
    %v416 = vpop.f32.mrf.mxu0
    %v417 = vadd.f32 0.0, %v416
    %418 = vmatmul.f32.gmra.mxu0 %v333
    %v419 = vpop.f32.mrf.mxu0
    %v420 = vadd.f32 0.0, %v419
    %421 = vmatmul.f32.gmra.mxu0 %v336
    %v422 = vpop.f32.mrf.mxu0
    %v423 = vadd.f32 0.0, %v422
    %424 = vmatmul.f32.gmra.mxu0 %v339
    %v425 = vpop.f32.mrf.mxu0
    %v426 = vadd.f32 0.0, %v425
    %427 = vmatmul.f32.gmra.mxu0 %v342
    %v428 = vpop.f32.mrf.mxu0
    %429 = vdwg.mxu0
    %v430 = vrot.slane %v411, 1
    %v431 = vrot.slane %v414, 1
    %v432 = vrot.slane %v417, 1
    %v433 = vrot.slane %v420, 1
    %v434 = vrot.slane %v423, 1
    %v435 = vrot.slane %v426, 1
    %v436 = vadd.f32 %v366, %v430
    %v437 = vadd.f32 %v369, %v431
    %v438 = vadd.f32 %v372, %v432
    %v439 = vadd.f32 %v375, %v433
    %v440 = vadd.f32 %v378, %v434
    %v441 = vadd.f32 %v381, %v435
    %s442 = scalar_lea.vmem %s3, 64
    %v443 = vld [vmem:[%s442] sm:$0xff]
    %v444 = vld [vmem:[%s442 + $0x8] sm:$0xff]
    %v445 = vld [vmem:[%s442 + $0x10] sm:$0xff]
    %v446 = vld [vmem:[%s442 + $0x18] sm:$0x3f]
    %v448 = vsel %vm344, %v446, 0
    %450 = vmatpush.msra.mxu0 0.0
    %451 = vmatpush.msra.mxu0 0.0
    %452 = vmatpush.msra.mxu0 0.0
    %453 = vmatpush.msra.mxu0 0.0
    %454 = vmatpush.msra.mxu0 0.0
    %455 = vmatpush.msra.mxu0 0.0
    %456 = vmatpush.msra.mxu0 0.0
    %457 = vmatpush.msra.mxu0 0.0
    %458 = vmatpush.msra.mxu0 0.0
    %459 = vmatpush.msra.mxu0 0.0
    %460 = vmatpush.msra.mxu0 0.0
    %461 = vmatpush.msra.mxu0 0.0
    %462 = vmatpush.msra.mxu0 %v448
    %463 = vmatpush.msra.mxu0 %v445
    %464 = vmatpush.msra.mxu0 %v444
    %465 = vmatpush.msra.mxu0 %v443
    %466 = vmatmul.f32.gmra.mxu0 %v324
    %v467 = vpop.f32.mrf.mxu0
    %468 = vmatmul.f32.gmra.mxu0 %v327
    %v469 = vpop.f32.mrf.mxu0
    %v470 = vadd.f32 0.0, %v469
    %471 = vmatmul.f32.gmra.mxu0 %v330
    %v472 = vpop.f32.mrf.mxu0
    %v473 = vadd.f32 0.0, %v472
    %474 = vmatmul.f32.gmra.mxu0 %v333
    %v475 = vpop.f32.mrf.mxu0
    %v476 = vadd.f32 0.0, %v475
    %477 = vmatmul.f32.gmra.mxu0 %v336
    %v478 = vpop.f32.mrf.mxu0
    %v479 = vadd.f32 0.0, %v478
    %480 = vmatmul.f32.gmra.mxu0 %v339
    %v481 = vpop.f32.mrf.mxu0
    %v482 = vadd.f32 0.0, %v481
    %483 = vmatmul.f32.gmra.mxu0 %v342
    %v484 = vpop.f32.mrf.mxu0
    %v485 = vadd.f32 0.0, %v484
    %486 = vdwg.mxu0
    %v487 = vadd.f32 %v436, %v470
    %v488 = vadd.f32 %v437, %v473
    %v489 = vadd.f32 %v438, %v476
    %v490 = vadd.f32 %v439, %v479
    %v491 = vadd.f32 %v440, %v482
    %v492 = vadd.f32 %v441, %v485
    %s493 = scalar_lea.vmem %s3, 96
    %v494 = vld [vmem:[%s493] sm:$0xff]
    %v495 = vld [vmem:[%s493 + $0x8] sm:$0xff]
    %v496 = vld [vmem:[%s493 + $0x10] sm:$0xff]
    %v497 = vld [vmem:[%s493 + $0x18] sm:$0x3f]
    %v499 = vsel %vm344, %v497, 0
    %501 = vmatpush.msra.mxu0 0.0
    %502 = vmatpush.msra.mxu0 0.0
    %503 = vmatpush.msra.mxu0 0.0
    %504 = vmatpush.msra.mxu0 0.0
    %505 = vmatpush.msra.mxu0 0.0
    %506 = vmatpush.msra.mxu0 0.0
    %507 = vmatpush.msra.mxu0 0.0
    %508 = vmatpush.msra.mxu0 0.0
    %509 = vmatpush.msra.mxu0 0.0
    %510 = vmatpush.msra.mxu0 0.0
    %511 = vmatpush.msra.mxu0 0.0
    %512 = vmatpush.msra.mxu0 0.0
    %513 = vmatpush.msra.mxu0 %v499
    %514 = vmatpush.msra.mxu0 %v496
    %515 = vmatpush.msra.mxu0 %v495
    %516 = vmatpush.msra.mxu0 %v494
    %517 = vmatmul.f32.gmra.mxu0 %v324
    %v518 = vpop.f32.mrf.mxu0
    %519 = vmatmul.f32.gmra.mxu0 %v327
    %v520 = vpop.f32.mrf.mxu0
    %v521 = vadd.f32 0.0, %v520
    %522 = vmatmul.f32.gmra.mxu0 %v330
    %v523 = vpop.f32.mrf.mxu0
    %v524 = vadd.f32 0.0, %v523
    %525 = vmatmul.f32.gmra.mxu0 %v333
    %v526 = vpop.f32.mrf.mxu0
    %v527 = vadd.f32 0.0, %v526
    %528 = vmatmul.f32.gmra.mxu0 %v336
    %v529 = vpop.f32.mrf.mxu0
    %v530 = vadd.f32 0.0, %v529
    %531 = vmatmul.f32.gmra.mxu0 %v339
    %v532 = vpop.f32.mrf.mxu0
    %v533 = vadd.f32 0.0, %v532
    %534 = vmatmul.f32.gmra.mxu0 %v342
    %v535 = vpop.f32.mrf.mxu0
    %v536 = vadd.f32 0.0, %v535
    %537 = vdwg.mxu0
    %v538 = vrot.slane %v521, 1
    %v539 = vrot.slane %v524, 1
    %v540 = vrot.slane %v527, 1
    %v541 = vrot.slane %v530, 1
    %v542 = vrot.slane %v533, 1
    %v543 = vrot.slane %v536, 1
    %v544 = vadd.f32 %v487, %v538
    %v545 = vadd.f32 %v488, %v539
    %v546 = vadd.f32 %v489, %v540
    %v547 = vadd.f32 %v490, %v541
    %v548 = vadd.f32 %v491, %v542
    %v549 = vadd.f32 %v492, %v543
    %v550 = vld [vmem:[%s4] sm:$0x1]
    %v552 = vperm.slane %v550, 0
    %v554 = vadd.f32 %v544, %v552
    %v555 = vadd.f32 %v545, %v552
    %v556 = vadd.f32 %v546, %v552
    %v557 = vadd.f32 %v547, %v552
    %v558 = vadd.f32 %v548, %v552
    %v559 = vadd.f32 %v549, %v552
    %v560 = vmax.f32 %v554, 0.0
    %v561 = vmax.f32 %v555, 0.0
    %v562 = vmax.f32 %v556, 0.0
    %v563 = vmax.f32 %v557, 0.0
    %v564 = vmax.f32 %v558, 0.0
    %v565 = vmax.f32 %v559, 0.0
    %v566 = vld [vmem:[%s6] sm:$0x1]
    %v567 = vmax.f32 %v560, %v561
    %v569 = vrot.slane %v567, 1
    %v571 = vmax.f32 %v567, %v569
    %v572 = vld [vmem:[%s5] sm:$0xff]
    %v573 = vld [vmem:[%s5 + $0x8] sm:$0xff]
    %vm574 = vcmask 130048
    %v576 = vsel %vm574, %v571, 0
    %578 = vmatpush.msra.mxu0 0.0
    %579 = vmatpush.msra.mxu0 0.0
    %580 = vmatpush.msra.mxu0 0.0
    %581 = vmatpush.msra.mxu0 0.0
    %582 = vmatpush.msra.mxu0 0.0
    %583 = vmatpush.msra.mxu0 0.0
    %584 = vmatpush.msra.mxu0 0.0
    %585 = vmatpush.msra.mxu0 0.0
    %586 = vmatpush.msra.mxu0 0.0
    %587 = vmatpush.msra.mxu0 0.0
    %588 = vmatpush.msra.mxu0 0.0
    %589 = vmatpush.msra.mxu0 0.0
    %590 = vmatpush.msra.mxu0 0.0
    %591 = vmatpush.msra.mxu0 0.0
    %592 = vmatpush.msra.mxu0 %v573
    %593 = vmatpush.msra.mxu0 %v572
    %594 = vmatmul.f32.gmra.mxu0 %v576
    %v595 = vpop.f32.mrf.mxu0
    %v596 = vadd.f32 0.0, %v595
    %597 = vdwg.mxu0
    %v598 = vadd.f32 %v566, %v596
    %s599 = scalar_lea.vmem %s5, 16
    %v600 = vld [vmem:[%s599] sm:$0xff]
    %v601 = vld [vmem:[%s599 + $0x8] sm:$0xff]
    %v602 = vrot.slane %v571, 2
    %v603 = vsel %vm574, %v602, 0
    %605 = vmatpush.msra.mxu0 0.0
    %606 = vmatpush.msra.mxu0 0.0
    %607 = vmatpush.msra.mxu0 0.0
    %608 = vmatpush.msra.mxu0 0.0
    %609 = vmatpush.msra.mxu0 0.0
    %610 = vmatpush.msra.mxu0 0.0
    %611 = vmatpush.msra.mxu0 0.0
    %612 = vmatpush.msra.mxu0 0.0
    %613 = vmatpush.msra.mxu0 0.0
    %614 = vmatpush.msra.mxu0 0.0
    %615 = vmatpush.msra.mxu0 0.0
    %616 = vmatpush.msra.mxu0 0.0
    %617 = vmatpush.msra.mxu0 0.0
    %618 = vmatpush.msra.mxu0 0.0
    %619 = vmatpush.msra.mxu0 %v601
    %620 = vmatpush.msra.mxu0 %v600
    %621 = vmatmul.f32.gmra.mxu0 %v603
    %v622 = vpop.f32.mrf.mxu0
    %v623 = vadd.f32 0.0, %v622
    %624 = vdwg.mxu0
    %v625 = vadd.f32 %v598, %v623
    %s626 = scalar_lea.vmem %s5, 32
    %v627 = vld [vmem:[%s626] sm:$0xff]
    %v628 = vld [vmem:[%s626 + $0x8] sm:$0xff]
    %v629 = vrot.slane %v571, 4
    %v630 = vsel %vm574, %v629, 0
    %632 = vmatpush.msra.mxu0 0.0
    %633 = vmatpush.msra.mxu0 0.0
    %634 = vmatpush.msra.mxu0 0.0
    %635 = vmatpush.msra.mxu0 0.0
    %636 = vmatpush.msra.mxu0 0.0
    %637 = vmatpush.msra.mxu0 0.0
    %638 = vmatpush.msra.mxu0 0.0
    %639 = vmatpush.msra.mxu0 0.0
    %640 = vmatpush.msra.mxu0 0.0
    %641 = vmatpush.msra.mxu0 0.0
    %642 = vmatpush.msra.mxu0 0.0
    %643 = vmatpush.msra.mxu0 0.0
    %644 = vmatpush.msra.mxu0 0.0
    %645 = vmatpush.msra.mxu0 0.0
    %646 = vmatpush.msra.mxu0 %v628
    %647 = vmatpush.msra.mxu0 %v627
    %648 = vmatmul.f32.gmra.mxu0 %v630
    %v649 = vpop.f32.mrf.mxu0
    %v650 = vadd.f32 0.0, %v649
    %651 = vdwg.mxu0
    %v652 = vadd.f32 %v625, %v650
    %v653 = vmax.f32 %v562, %v563
    %v655 = vrot.slane %v653, 1
    %v657 = vmax.f32 %v653, %v655
    %s658 = scalar_lea.vmem %s5, 48
    %v659 = vld [vmem:[%s658] sm:$0xff]
    %v660 = vld [vmem:[%s658 + $0x8] sm:$0xff]
    %v662 = vsel %vm574, %v657, 0
    %664 = vmatpush.msra.mxu0 0.0
    %665 = vmatpush.msra.mxu0 0.0
    %666 = vmatpush.msra.mxu0 0.0
    %667 = vmatpush.msra.mxu0 0.0
    %668 = vmatpush.msra.mxu0 0.0
    %669 = vmatpush.msra.mxu0 0.0
    %670 = vmatpush.msra.mxu0 0.0
    %671 = vmatpush.msra.mxu0 0.0
    %672 = vmatpush.msra.mxu0 0.0
    %673 = vmatpush.msra.mxu0 0.0
    %674 = vmatpush.msra.mxu0 0.0
    %675 = vmatpush.msra.mxu0 0.0
    %676 = vmatpush.msra.mxu0 0.0
    %677 = vmatpush.msra.mxu0 0.0
    %678 = vmatpush.msra.mxu0 %v660
    %679 = vmatpush.msra.mxu0 %v659
    %680 = vmatmul.f32.gmra.mxu0 %v662
    %v681 = vpop.f32.mrf.mxu0
    %v682 = vadd.f32 0.0, %v681
    %683 = vdwg.mxu0
    %v684 = vadd.f32 %v652, %v682
    %s685 = scalar_lea.vmem %s5, 64
    %v686 = vld [vmem:[%s685] sm:$0xff]
    %v687 = vld [vmem:[%s685 + $0x8] sm:$0xff]
    %v688 = vrot.slane %v657, 2
    %v689 = vsel %vm574, %v688, 0
    %691 = vmatpush.msra.mxu0 0.0
    %692 = vmatpush.msra.mxu0 0.0
    %693 = vmatpush.msra.mxu0 0.0
    %694 = vmatpush.msra.mxu0 0.0
    %695 = vmatpush.msra.mxu0 0.0
    %696 = vmatpush.msra.mxu0 0.0
    %697 = vmatpush.msra.mxu0 0.0
    %698 = vmatpush.msra.mxu0 0.0
    %699 = vmatpush.msra.mxu0 0.0
    %700 = vmatpush.msra.mxu0 0.0
    %701 = vmatpush.msra.mxu0 0.0
    %702 = vmatpush.msra.mxu0 0.0
    %703 = vmatpush.msra.mxu0 0.0
    %704 = vmatpush.msra.mxu0 0.0
    %705 = vmatpush.msra.mxu0 %v687
    %706 = vmatpush.msra.mxu0 %v686
    %707 = vmatmul.f32.gmra.mxu0 %v689
    %v708 = vpop.f32.mrf.mxu0
    %v709 = vadd.f32 0.0, %v708
    %710 = vdwg.mxu0
    %v711 = vadd.f32 %v684, %v709
    %s712 = scalar_lea.vmem %s5, 80
    %v713 = vld [vmem:[%s712] sm:$0xff]
    %v714 = vld [vmem:[%s712 + $0x8] sm:$0xff]
    %v715 = vrot.slane %v657, 4
    %v716 = vsel %vm574, %v715, 0
    %718 = vmatpush.msra.mxu0 0.0
    %719 = vmatpush.msra.mxu0 0.0
    %720 = vmatpush.msra.mxu0 0.0
    %721 = vmatpush.msra.mxu0 0.0
    %722 = vmatpush.msra.mxu0 0.0
    %723 = vmatpush.msra.mxu0 0.0
    %724 = vmatpush.msra.mxu0 0.0
    %725 = vmatpush.msra.mxu0 0.0
    %726 = vmatpush.msra.mxu0 0.0
    %727 = vmatpush.msra.mxu0 0.0
    %728 = vmatpush.msra.mxu0 0.0
    %729 = vmatpush.msra.mxu0 0.0
    %730 = vmatpush.msra.mxu0 0.0
    %731 = vmatpush.msra.mxu0 0.0
    %732 = vmatpush.msra.mxu0 %v714
    %733 = vmatpush.msra.mxu0 %v713
    %734 = vmatmul.f32.gmra.mxu0 %v716
    %v735 = vpop.f32.mrf.mxu0
    %v736 = vadd.f32 0.0, %v735
    %737 = vdwg.mxu0
    %v738 = vadd.f32 %v711, %v736
    %v739 = vmax.f32 %v564, %v565
    %v741 = vrot.slane %v739, 1
    %v743 = vmax.f32 %v739, %v741
    %s744 = scalar_lea.vmem %s5, 96
    %v745 = vld [vmem:[%s744] sm:$0xff]
    %v746 = vld [vmem:[%s744 + $0x8] sm:$0xff]
    %v748 = vsel %vm574, %v743, 0
    %750 = vmatpush.msra.mxu0 0.0
    %751 = vmatpush.msra.mxu0 0.0
    %752 = vmatpush.msra.mxu0 0.0
    %753 = vmatpush.msra.mxu0 0.0
    %754 = vmatpush.msra.mxu0 0.0
    %755 = vmatpush.msra.mxu0 0.0
    %756 = vmatpush.msra.mxu0 0.0
    %757 = vmatpush.msra.mxu0 0.0
    %758 = vmatpush.msra.mxu0 0.0
    %759 = vmatpush.msra.mxu0 0.0
    %760 = vmatpush.msra.mxu0 0.0
    %761 = vmatpush.msra.mxu0 0.0
    %762 = vmatpush.msra.mxu0 0.0
    %763 = vmatpush.msra.mxu0 0.0
    %764 = vmatpush.msra.mxu0 %v746
    %765 = vmatpush.msra.mxu0 %v745
    %766 = vmatmul.f32.gmra.mxu0 %v748
    %v767 = vpop.f32.mrf.mxu0
    %v768 = vadd.f32 0.0, %v767
    %769 = vdwg.mxu0
    %v770 = vadd.f32 %v738, %v768
    %s771 = scalar_lea.vmem %s5, 112
    %v772 = vld [vmem:[%s771] sm:$0xff]
    %v773 = vld [vmem:[%s771 + $0x8] sm:$0xff]
    %v774 = vrot.slane %v743, 2
    %v775 = vsel %vm574, %v774, 0
    %777 = vmatpush.msra.mxu0 0.0
    %778 = vmatpush.msra.mxu0 0.0
    %779 = vmatpush.msra.mxu0 0.0
    %780 = vmatpush.msra.mxu0 0.0
    %781 = vmatpush.msra.mxu0 0.0
    %782 = vmatpush.msra.mxu0 0.0
    %783 = vmatpush.msra.mxu0 0.0
    %784 = vmatpush.msra.mxu0 0.0
    %785 = vmatpush.msra.mxu0 0.0
    %786 = vmatpush.msra.mxu0 0.0
    %787 = vmatpush.msra.mxu0 0.0
    %788 = vmatpush.msra.mxu0 0.0
    %789 = vmatpush.msra.mxu0 0.0
    %790 = vmatpush.msra.mxu0 0.0
    %791 = vmatpush.msra.mxu0 %v773
    %792 = vmatpush.msra.mxu0 %v772
    %793 = vmatmul.f32.gmra.mxu0 %v775
    %v794 = vpop.f32.mrf.mxu0
    %v795 = vadd.f32 0.0, %v794
    %796 = vdwg.mxu0
    %v797 = vadd.f32 %v770, %v795
    %s798 = scalar_lea.vmem %s5, 128
    %v799 = vld [vmem:[%s798] sm:$0xff]
    %v800 = vld [vmem:[%s798 + $0x8] sm:$0xff]
    %v801 = vrot.slane %v743, 4
    %v802 = vsel %vm574, %v801, 0
    %804 = vmatpush.msra.mxu0 0.0
    %805 = vmatpush.msra.mxu0 0.0
    %806 = vmatpush.msra.mxu0 0.0
    %807 = vmatpush.msra.mxu0 0.0
    %808 = vmatpush.msra.mxu0 0.0
    %809 = vmatpush.msra.mxu0 0.0
    %810 = vmatpush.msra.mxu0 0.0
    %811 = vmatpush.msra.mxu0 0.0
    %812 = vmatpush.msra.mxu0 0.0
    %813 = vmatpush.msra.mxu0 0.0
    %814 = vmatpush.msra.mxu0 0.0
    %815 = vmatpush.msra.mxu0 0.0
    %816 = vmatpush.msra.mxu0 0.0
    %817 = vmatpush.msra.mxu0 0.0
    %818 = vmatpush.msra.mxu0 %v800
    %819 = vmatpush.msra.mxu0 %v799
    %820 = vmatmul.f32.gmra.mxu0 %v802
    %v821 = vpop.f32.mrf.mxu0
    %v822 = vadd.f32 0.0, %v821
    %823 = vdwg.mxu0
    %v824 = vadd.f32 %v797, %v822
    %v825 = vmax.f32 %v824, 0.0
    %vm826 = vcmask 679936
    %827 = vst.msk [vmem:[#allocation2] sm:$0x1] %vm826, %v825
    %v828 = vld [vmem:[%s0 + $0x4] sm:$0xf]
    %v829 = vld [vmem:[%s1] sm:$0xf]
    %830 = vxpose.xlu0.b32.start [1/16] %v828, 128
    %831 = vxpose.xlu0.b32.cont [2/16] 0.0, 128
    %832 = vxpose.xlu0.b32.cont [3/16] 0.0, 128
    %833 = vxpose.xlu0.b32.cont [4/16] 0.0, 128
    %834 = vxpose.xlu0.b32.cont [5/16] 0.0, 128
    %835 = vxpose.xlu0.b32.cont [6/16] 0.0, 128
    %836 = vxpose.xlu0.b32.cont [7/16] 0.0, 128
    %837 = vxpose.xlu0.b32.cont [8/16] 0.0, 128
    %838 = vxpose.xlu0.b32.cont [9/16] 0.0, 128
    %839 = vxpose.xlu0.b32.cont [10/16] 0.0, 128
    %840 = vxpose.xlu0.b32.cont [11/16] 0.0, 128
    %841 = vxpose.xlu0.b32.cont [12/16] 0.0, 128
    %842 = vxpose.xlu0.b32.cont [13/16] 0.0, 128
    %843 = vxpose.xlu0.b32.cont [14/16] 0.0, 128
    %844 = vxpose.xlu0.b32.cont [15/16] 0.0, 128
    %845 = vxpose.xlu0.b32.end [16/16] 0.0, 128
    %v846 = vpop.trf.xlu0
    %v847 = vpop.trf.xlu0
    %v848 = vpop.trf.xlu0
    %v849 = vpop.trf.xlu0
    %v850 = vpop.trf.xlu0
    %v851 = vpop.trf.xlu0
    %v852 = vpop.trf.xlu0
    %v853 = vpop.trf.xlu0
    %v854 = vpop.trf.xlu0
    %v855 = vpop.trf.xlu0
    %v856 = vpop.trf.xlu0
    %v857 = vpop.trf.xlu0
    %v858 = vpop.trf.xlu0
    %v859 = vpop.trf.xlu0
    %v860 = vpop.trf.xlu0
    %v861 = vpop.trf.xlu0
    %v863 = vsel %vm61, %v846, 0
    %v866 = vsel %vm61, %v847, 0
    %v869 = vsel %vm61, %v848, 0
    %v872 = vsel %vm61, %v849, 0
    %v875 = vsel %vm61, %v850, 0
    %v878 = vsel %vm61, %v851, 0
    %v881 = vsel %vm61, %v852, 0
    %v884 = vsel %vm61, %v853, 0
    %v887 = vsel %vm86, %v829, 0
    %889 = vmatpush.msra.mxu0 0.0
    %890 = vmatpush.msra.mxu0 0.0
    %891 = vmatpush.msra.mxu0 0.0
    %892 = vmatpush.msra.mxu0 0.0
    %893 = vmatpush.msra.mxu0 0.0
    %894 = vmatpush.msra.mxu0 0.0
    %895 = vmatpush.msra.mxu0 0.0
    %896 = vmatpush.msra.mxu0 0.0
    %897 = vmatpush.msra.mxu0 0.0
    %898 = vmatpush.msra.mxu0 0.0
    %899 = vmatpush.msra.mxu0 0.0
    %900 = vmatpush.msra.mxu0 0.0
    %901 = vmatpush.msra.mxu0 0.0
    %902 = vmatpush.msra.mxu0 0.0
    %903 = vmatpush.msra.mxu0 0.0
    %904 = vmatpush.msra.mxu0 %v887
    %905 = vmatmul.f32.gmra.mxu0 %v863
    %v906 = vpop.f32.mrf.mxu0
    %v907 = vadd.f32 0.0, %v906
    %908 = vmatmul.f32.gmra.mxu0 %v866
    %v909 = vpop.f32.mrf.mxu0
    %v910 = vadd.f32 0.0, %v909
    %911 = vmatmul.f32.gmra.mxu0 %v869
    %v912 = vpop.f32.mrf.mxu0
    %v913 = vadd.f32 0.0, %v912
    %914 = vmatmul.f32.gmra.mxu0 %v872
    %v915 = vpop.f32.mrf.mxu0
    %v916 = vadd.f32 0.0, %v915
    %917 = vmatmul.f32.gmra.mxu0 %v875
    %v918 = vpop.f32.mrf.mxu0
    %v919 = vadd.f32 0.0, %v918
    %920 = vmatmul.f32.gmra.mxu0 %v878
    %v921 = vpop.f32.mrf.mxu0
    %v922 = vadd.f32 0.0, %v921
    %923 = vmatmul.f32.gmra.mxu0 %v881
    %v924 = vpop.f32.mrf.mxu0
    %v925 = vadd.f32 0.0, %v924
    %926 = vmatmul.f32.gmra.mxu0 %v884
    %v927 = vpop.f32.mrf.mxu0
    %928 = vdwg.mxu0
    %v929 = vld [vmem:[%s130] sm:$0xf]
    %v931 = vsel %vm86, %v929, 0
    %933 = vmatpush.msra.mxu0 0.0
    %934 = vmatpush.msra.mxu0 0.0
    %935 = vmatpush.msra.mxu0 0.0
    %936 = vmatpush.msra.mxu0 0.0
    %937 = vmatpush.msra.mxu0 0.0
    %938 = vmatpush.msra.mxu0 0.0
    %939 = vmatpush.msra.mxu0 0.0
    %940 = vmatpush.msra.mxu0 0.0
    %941 = vmatpush.msra.mxu0 0.0
    %942 = vmatpush.msra.mxu0 0.0
    %943 = vmatpush.msra.mxu0 0.0
    %944 = vmatpush.msra.mxu0 0.0
    %945 = vmatpush.msra.mxu0 0.0
    %946 = vmatpush.msra.mxu0 0.0
    %947 = vmatpush.msra.mxu0 0.0
    %948 = vmatpush.msra.mxu0 %v931
    %949 = vmatmul.f32.gmra.mxu0 %v863
    %v950 = vpop.f32.mrf.mxu0
    %v951 = vadd.f32 0.0, %v950
    %952 = vmatmul.f32.gmra.mxu0 %v866
    %v953 = vpop.f32.mrf.mxu0
    %v954 = vadd.f32 0.0, %v953
    %955 = vmatmul.f32.gmra.mxu0 %v869
    %v956 = vpop.f32.mrf.mxu0
    %v957 = vadd.f32 0.0, %v956
    %958 = vmatmul.f32.gmra.mxu0 %v872
    %v959 = vpop.f32.mrf.mxu0
    %v960 = vadd.f32 0.0, %v959
    %961 = vmatmul.f32.gmra.mxu0 %v875
    %v962 = vpop.f32.mrf.mxu0
    %v963 = vadd.f32 0.0, %v962
    %964 = vmatmul.f32.gmra.mxu0 %v878
    %v965 = vpop.f32.mrf.mxu0
    %v966 = vadd.f32 0.0, %v965
    %967 = vmatmul.f32.gmra.mxu0 %v881
    %v968 = vpop.f32.mrf.mxu0
    %v969 = vadd.f32 0.0, %v968
    %970 = vmatmul.f32.gmra.mxu0 %v884
    %v971 = vpop.f32.mrf.mxu0
    %972 = vdwg.mxu0
    %v973 = vrot.slane %v951, 1
    %v974 = vrot.slane %v954, 1
    %v975 = vrot.slane %v957, 1
    %v976 = vrot.slane %v960, 1
    %v977 = vrot.slane %v963, 1
    %v978 = vrot.slane %v966, 1
    %v979 = vrot.slane %v969, 1
    %v980 = vadd.f32 %v907, %v973
    %v981 = vadd.f32 %v910, %v974
    %v982 = vadd.f32 %v913, %v975
    %v983 = vadd.f32 %v916, %v976
    %v984 = vadd.f32 %v919, %v977
    %v985 = vadd.f32 %v922, %v978
    %v986 = vadd.f32 %v925, %v979
    %v987 = vld [vmem:[%s189] sm:$0xf]
    %v989 = vsel %vm86, %v987, 0
    %991 = vmatpush.msra.mxu0 0.0
    %992 = vmatpush.msra.mxu0 0.0
    %993 = vmatpush.msra.mxu0 0.0
    %994 = vmatpush.msra.mxu0 0.0
    %995 = vmatpush.msra.mxu0 0.0
    %996 = vmatpush.msra.mxu0 0.0
    %997 = vmatpush.msra.mxu0 0.0
    %998 = vmatpush.msra.mxu0 0.0
    %999 = vmatpush.msra.mxu0 0.0
    %1000 = vmatpush.msra.mxu0 0.0
    %1001 = vmatpush.msra.mxu0 0.0
    %1002 = vmatpush.msra.mxu0 0.0
    %1003 = vmatpush.msra.mxu0 0.0
    %1004 = vmatpush.msra.mxu0 0.0
    %1005 = vmatpush.msra.mxu0 0.0
    %1006 = vmatpush.msra.mxu0 %v989
    %1007 = vmatmul.f32.gmra.mxu0 %v863
    %v1008 = vpop.f32.mrf.mxu0
    %1009 = vmatmul.f32.gmra.mxu0 %v866
    %v1010 = vpop.f32.mrf.mxu0
    %v1011 = vadd.f32 0.0, %v1010
    %1012 = vmatmul.f32.gmra.mxu0 %v869
    %v1013 = vpop.f32.mrf.mxu0
    %v1014 = vadd.f32 0.0, %v1013
    %1015 = vmatmul.f32.gmra.mxu0 %v872
    %v1016 = vpop.f32.mrf.mxu0
    %v1017 = vadd.f32 0.0, %v1016
    %1018 = vmatmul.f32.gmra.mxu0 %v875
    %v1019 = vpop.f32.mrf.mxu0
    %v1020 = vadd.f32 0.0, %v1019
    %1021 = vmatmul.f32.gmra.mxu0 %v878
    %v1022 = vpop.f32.mrf.mxu0
    %v1023 = vadd.f32 0.0, %v1022
    %1024 = vmatmul.f32.gmra.mxu0 %v881
    %v1025 = vpop.f32.mrf.mxu0
    %v1026 = vadd.f32 0.0, %v1025
    %1027 = vmatmul.f32.gmra.mxu0 %v884
    %v1028 = vpop.f32.mrf.mxu0
    %v1029 = vadd.f32 0.0, %v1028
    %1030 = vdwg.mxu0
    %v1031 = vadd.f32 %v980, %v1011
    %v1032 = vadd.f32 %v981, %v1014
    %v1033 = vadd.f32 %v982, %v1017
    %v1034 = vadd.f32 %v983, %v1020
    %v1035 = vadd.f32 %v984, %v1023
    %v1036 = vadd.f32 %v985, %v1026
    %v1037 = vadd.f32 %v986, %v1029
    %v1038 = vld [vmem:[%s241] sm:$0xf]
    %v1040 = vsel %vm86, %v1038, 0
    %1042 = vmatpush.msra.mxu0 0.0
    %1043 = vmatpush.msra.mxu0 0.0
    %1044 = vmatpush.msra.mxu0 0.0
    %1045 = vmatpush.msra.mxu0 0.0
    %1046 = vmatpush.msra.mxu0 0.0
    %1047 = vmatpush.msra.mxu0 0.0
    %1048 = vmatpush.msra.mxu0 0.0
    %1049 = vmatpush.msra.mxu0 0.0
    %1050 = vmatpush.msra.mxu0 0.0
    %1051 = vmatpush.msra.mxu0 0.0
    %1052 = vmatpush.msra.mxu0 0.0
    %1053 = vmatpush.msra.mxu0 0.0
    %1054 = vmatpush.msra.mxu0 0.0
    %1055 = vmatpush.msra.mxu0 0.0
    %1056 = vmatpush.msra.mxu0 0.0
    %1057 = vmatpush.msra.mxu0 %v1040
    %1058 = vmatmul.f32.gmra.mxu0 %v863
    %v1059 = vpop.f32.mrf.mxu0
    %1060 = vmatmul.f32.gmra.mxu0 %v866
    %v1061 = vpop.f32.mrf.mxu0
    %v1062 = vadd.f32 0.0, %v1061
    %1063 = vmatmul.f32.gmra.mxu0 %v869
    %v1064 = vpop.f32.mrf.mxu0
    %v1065 = vadd.f32 0.0, %v1064
    %1066 = vmatmul.f32.gmra.mxu0 %v872
    %v1067 = vpop.f32.mrf.mxu0
    %v1068 = vadd.f32 0.0, %v1067
    %1069 = vmatmul.f32.gmra.mxu0 %v875
    %v1070 = vpop.f32.mrf.mxu0
    %v1071 = vadd.f32 0.0, %v1070
    %1072 = vmatmul.f32.gmra.mxu0 %v878
    %v1073 = vpop.f32.mrf.mxu0
    %v1074 = vadd.f32 0.0, %v1073
    %1075 = vmatmul.f32.gmra.mxu0 %v881
    %v1076 = vpop.f32.mrf.mxu0
    %v1077 = vadd.f32 0.0, %v1076
    %1078 = vmatmul.f32.gmra.mxu0 %v884
    %v1079 = vpop.f32.mrf.mxu0
    %v1080 = vadd.f32 0.0, %v1079
    %1081 = vdwg.mxu0
    %v1082 = vrot.slane %v1062, 1
    %v1083 = vrot.slane %v1065, 1
    %v1084 = vrot.slane %v1068, 1
    %v1085 = vrot.slane %v1071, 1
    %v1086 = vrot.slane %v1074, 1
    %v1087 = vrot.slane %v1077, 1
    %v1088 = vrot.slane %v1080, 1
    %v1089 = vadd.f32 %v1031, %v1082
    %v1090 = vadd.f32 %v1032, %v1083
    %v1091 = vadd.f32 %v1033, %v1084
    %v1092 = vadd.f32 %v1034, %v1085
    %v1093 = vadd.f32 %v1035, %v1086
    %v1094 = vadd.f32 %v1036, %v1087
    %v1095 = vadd.f32 %v1037, %v1088
    %v1096 = vld [vmem:[%s2] sm:$0x1]
    %v1098 = vperm.slane %v1096, 0
    %v1100 = vadd.f32 %v1089, %v1098
    %v1101 = vadd.f32 %v1090, %v1098
    %v1102 = vadd.f32 %v1091, %v1098
    %v1103 = vadd.f32 %v1092, %v1098
    %v1104 = vadd.f32 %v1093, %v1098
    %v1105 = vadd.f32 %v1094, %v1098
    %v1106 = vadd.f32 %v1095, %v1098
    %v1107 = vmax.f32 %v1100, 0.0
    %v1108 = vmax.f32 %v1101, 0.0
    %v1109 = vmax.f32 %v1102, 0.0
    %v1110 = vmax.f32 %v1103, 0.0
    %v1111 = vmax.f32 %v1104, 0.0
    %v1112 = vmax.f32 %v1105, 0.0
    %v1113 = vmax.f32 %v1106, 0.0
    %v1114 = vld [vmem:[%s3] sm:$0xff]
    %v1115 = vld [vmem:[%s3 + $0x8] sm:$0xff]
    %v1116 = vld [vmem:[%s3 + $0x10] sm:$0xff]
    %v1117 = vld [vmem:[%s3 + $0x18] sm:$0x3f]
    %v1119 = vsel %vm322, %v1107, 0
    %v1122 = vsel %vm322, %v1108, 0
    %v1125 = vsel %vm322, %v1109, 0
    %v1128 = vsel %vm322, %v1110, 0
    %v1131 = vsel %vm322, %v1111, 0
    %v1134 = vsel %vm322, %v1112, 0
    %v1137 = vsel %vm322, %v1113, 0
    %v1140 = vsel %vm344, %v1117, 0
    %1142 = vmatpush.msra.mxu0 0.0
    %1143 = vmatpush.msra.mxu0 0.0
    %1144 = vmatpush.msra.mxu0 0.0
    %1145 = vmatpush.msra.mxu0 0.0
    %1146 = vmatpush.msra.mxu0 0.0
    %1147 = vmatpush.msra.mxu0 0.0
    %1148 = vmatpush.msra.mxu0 0.0
    %1149 = vmatpush.msra.mxu0 0.0
    %1150 = vmatpush.msra.mxu0 0.0
    %1151 = vmatpush.msra.mxu0 0.0
    %1152 = vmatpush.msra.mxu0 0.0
    %1153 = vmatpush.msra.mxu0 0.0
    %1154 = vmatpush.msra.mxu0 %v1140
    %1155 = vmatpush.msra.mxu0 %v1116
    %1156 = vmatpush.msra.mxu0 %v1115
    %1157 = vmatpush.msra.mxu0 %v1114
    %1158 = vmatmul.f32.gmra.mxu0 %v1119
    %v1159 = vpop.f32.mrf.mxu0
    %v1160 = vadd.f32 0.0, %v1159
    %1161 = vmatmul.f32.gmra.mxu0 %v1122
    %v1162 = vpop.f32.mrf.mxu0
    %v1163 = vadd.f32 0.0, %v1162
    %1164 = vmatmul.f32.gmra.mxu0 %v1125
    %v1165 = vpop.f32.mrf.mxu0
    %v1166 = vadd.f32 0.0, %v1165
    %1167 = vmatmul.f32.gmra.mxu0 %v1128
    %v1168 = vpop.f32.mrf.mxu0
    %v1169 = vadd.f32 0.0, %v1168
    %1170 = vmatmul.f32.gmra.mxu0 %v1131
    %v1171 = vpop.f32.mrf.mxu0
    %v1172 = vadd.f32 0.0, %v1171
    %1173 = vmatmul.f32.gmra.mxu0 %v1134
    %v1174 = vpop.f32.mrf.mxu0
    %v1175 = vadd.f32 0.0, %v1174
    %1176 = vmatmul.f32.gmra.mxu0 %v1137
    %v1177 = vpop.f32.mrf.mxu0
    %1178 = vdwg.mxu0
    %v1179 = vld [vmem:[%s385] sm:$0xff]
    %v1180 = vld [vmem:[%s385 + $0x8] sm:$0xff]
    %v1181 = vld [vmem:[%s385 + $0x10] sm:$0xff]
    %v1182 = vld [vmem:[%s385 + $0x18] sm:$0x3f]
    %v1184 = vsel %vm344, %v1182, 0
    %1186 = vmatpush.msra.mxu0 0.0
    %1187 = vmatpush.msra.mxu0 0.0
    %1188 = vmatpush.msra.mxu0 0.0
    %1189 = vmatpush.msra.mxu0 0.0
    %1190 = vmatpush.msra.mxu0 0.0
    %1191 = vmatpush.msra.mxu0 0.0
    %1192 = vmatpush.msra.mxu0 0.0
    %1193 = vmatpush.msra.mxu0 0.0
    %1194 = vmatpush.msra.mxu0 0.0
    %1195 = vmatpush.msra.mxu0 0.0
    %1196 = vmatpush.msra.mxu0 0.0
    %1197 = vmatpush.msra.mxu0 0.0
    %1198 = vmatpush.msra.mxu0 %v1184
    %1199 = vmatpush.msra.mxu0 %v1181
    %1200 = vmatpush.msra.mxu0 %v1180
    %1201 = vmatpush.msra.mxu0 %v1179
    %1202 = vmatmul.f32.gmra.mxu0 %v1119
    %v1203 = vpop.f32.mrf.mxu0
    %v1204 = vadd.f32 0.0, %v1203
    %1205 = vmatmul.f32.gmra.mxu0 %v1122
    %v1206 = vpop.f32.mrf.mxu0
    %v1207 = vadd.f32 0.0, %v1206
    %1208 = vmatmul.f32.gmra.mxu0 %v1125
    %v1209 = vpop.f32.mrf.mxu0
    %v1210 = vadd.f32 0.0, %v1209
    %1211 = vmatmul.f32.gmra.mxu0 %v1128
    %v1212 = vpop.f32.mrf.mxu0
    %v1213 = vadd.f32 0.0, %v1212
    %1214 = vmatmul.f32.gmra.mxu0 %v1131
    %v1215 = vpop.f32.mrf.mxu0
    %v1216 = vadd.f32 0.0, %v1215
    %1217 = vmatmul.f32.gmra.mxu0 %v1134
    %v1218 = vpop.f32.mrf.mxu0
    %v1219 = vadd.f32 0.0, %v1218
    %1220 = vmatmul.f32.gmra.mxu0 %v1137
    %v1221 = vpop.f32.mrf.mxu0
    %1222 = vdwg.mxu0
    %v1223 = vrot.slane %v1204, 1
    %v1224 = vrot.slane %v1207, 1
    %v1225 = vrot.slane %v1210, 1
    %v1226 = vrot.slane %v1213, 1
    %v1227 = vrot.slane %v1216, 1
    %v1228 = vrot.slane %v1219, 1
    %v1229 = vadd.f32 %v1160, %v1223
    %v1230 = vadd.f32 %v1163, %v1224
    %v1231 = vadd.f32 %v1166, %v1225
    %v1232 = vadd.f32 %v1169, %v1226
    %v1233 = vadd.f32 %v1172, %v1227
    %v1234 = vadd.f32 %v1175, %v1228
    %v1235 = vld [vmem:[%s442] sm:$0xff]
    %v1236 = vld [vmem:[%s442 + $0x8] sm:$0xff]
    %v1237 = vld [vmem:[%s442 + $0x10] sm:$0xff]
    %v1238 = vld [vmem:[%s442 + $0x18] sm:$0x3f]
    %v1240 = vsel %vm344, %v1238, 0
    %1242 = vmatpush.msra.mxu0 0.0
    %1243 = vmatpush.msra.mxu0 0.0
    %1244 = vmatpush.msra.mxu0 0.0
    %1245 = vmatpush.msra.mxu0 0.0
    %1246 = vmatpush.msra.mxu0 0.0
    %1247 = vmatpush.msra.mxu0 0.0
    %1248 = vmatpush.msra.mxu0 0.0
    %1249 = vmatpush.msra.mxu0 0.0
    %1250 = vmatpush.msra.mxu0 0.0
    %1251 = vmatpush.msra.mxu0 0.0
    %1252 = vmatpush.msra.mxu0 0.0
    %1253 = vmatpush.msra.mxu0 0.0
    %1254 = vmatpush.msra.mxu0 %v1240
    %1255 = vmatpush.msra.mxu0 %v1237
    %1256 = vmatpush.msra.mxu0 %v1236
    %1257 = vmatpush.msra.mxu0 %v1235
    %1258 = vmatmul.f32.gmra.mxu0 %v1119
    %v1259 = vpop.f32.mrf.mxu0
    %1260 = vmatmul.f32.gmra.mxu0 %v1122
    %v1261 = vpop.f32.mrf.mxu0
    %v1262 = vadd.f32 0.0, %v1261
    %1263 = vmatmul.f32.gmra.mxu0 %v1125
    %v1264 = vpop.f32.mrf.mxu0
    %v1265 = vadd.f32 0.0, %v1264
    %1266 = vmatmul.f32.gmra.mxu0 %v1128
    %v1267 = vpop.f32.mrf.mxu0
    %v1268 = vadd.f32 0.0, %v1267
    %1269 = vmatmul.f32.gmra.mxu0 %v1131
    %v1270 = vpop.f32.mrf.mxu0
    %v1271 = vadd.f32 0.0, %v1270
    %1272 = vmatmul.f32.gmra.mxu0 %v1134
    %v1273 = vpop.f32.mrf.mxu0
    %v1274 = vadd.f32 0.0, %v1273
    %1275 = vmatmul.f32.gmra.mxu0 %v1137
    %v1276 = vpop.f32.mrf.mxu0
    %v1277 = vadd.f32 0.0, %v1276
    %1278 = vdwg.mxu0
    %v1279 = vadd.f32 %v1229, %v1262
    %v1280 = vadd.f32 %v1230, %v1265
    %v1281 = vadd.f32 %v1231, %v1268
    %v1282 = vadd.f32 %v1232, %v1271
    %v1283 = vadd.f32 %v1233, %v1274
    %v1284 = vadd.f32 %v1234, %v1277
    %v1285 = vld [vmem:[%s493] sm:$0xff]
    %v1286 = vld [vmem:[%s493 + $0x8] sm:$0xff]
    %v1287 = vld [vmem:[%s493 + $0x10] sm:$0xff]
    %v1288 = vld [vmem:[%s493 + $0x18] sm:$0x3f]
    %v1290 = vsel %vm344, %v1288, 0
    %1292 = vmatpush.msra.mxu0 0.0
    %1293 = vmatpush.msra.mxu0 0.0
    %1294 = vmatpush.msra.mxu0 0.0
    %1295 = vmatpush.msra.mxu0 0.0
    %1296 = vmatpush.msra.mxu0 0.0
    %1297 = vmatpush.msra.mxu0 0.0
    %1298 = vmatpush.msra.mxu0 0.0
    %1299 = vmatpush.msra.mxu0 0.0
    %1300 = vmatpush.msra.mxu0 0.0
    %1301 = vmatpush.msra.mxu0 0.0
    %1302 = vmatpush.msra.mxu0 0.0
    %1303 = vmatpush.msra.mxu0 0.0
    %1304 = vmatpush.msra.mxu0 %v1290
    %1305 = vmatpush.msra.mxu0 %v1287
    %1306 = vmatpush.msra.mxu0 %v1286
    %1307 = vmatpush.msra.mxu0 %v1285
    %1308 = vmatmul.f32.gmra.mxu0 %v1119
    %v1309 = vpop.f32.mrf.mxu0
    %1310 = vmatmul.f32.gmra.mxu0 %v1122
    %v1311 = vpop.f32.mrf.mxu0
    %v1312 = vadd.f32 0.0, %v1311
    %1313 = vmatmul.f32.gmra.mxu0 %v1125
    %v1314 = vpop.f32.mrf.mxu0
    %v1315 = vadd.f32 0.0, %v1314
    %1316 = vmatmul.f32.gmra.mxu0 %v1128
    %v1317 = vpop.f32.mrf.mxu0
    %v1318 = vadd.f32 0.0, %v1317
    %1319 = vmatmul.f32.gmra.mxu0 %v1131
    %v1320 = vpop.f32.mrf.mxu0
    %v1321 = vadd.f32 0.0, %v1320
    %1322 = vmatmul.f32.gmra.mxu0 %v1134
    %v1323 = vpop.f32.mrf.mxu0
    %v1324 = vadd.f32 0.0, %v1323
    %1325 = vmatmul.f32.gmra.mxu0 %v1137
    %v1326 = vpop.f32.mrf.mxu0
    %v1327 = vadd.f32 0.0, %v1326
    %1328 = vdwg.mxu0
    %v1329 = vrot.slane %v1312, 1
    %v1330 = vrot.slane %v1315, 1
    %v1331 = vrot.slane %v1318, 1
    %v1332 = vrot.slane %v1321, 1
    %v1333 = vrot.slane %v1324, 1
    %v1334 = vrot.slane %v1327, 1
    %v1335 = vadd.f32 %v1279, %v1329
    %v1336 = vadd.f32 %v1280, %v1330
    %v1337 = vadd.f32 %v1281, %v1331
    %v1338 = vadd.f32 %v1282, %v1332
    %v1339 = vadd.f32 %v1283, %v1333
    %v1340 = vadd.f32 %v1284, %v1334
    %v1341 = vld [vmem:[%s4] sm:$0x1]
    %v1343 = vperm.slane %v1341, 0
    %v1345 = vadd.f32 %v1335, %v1343
    %v1346 = vadd.f32 %v1336, %v1343
    %v1347 = vadd.f32 %v1337, %v1343
    %v1348 = vadd.f32 %v1338, %v1343
    %v1349 = vadd.f32 %v1339, %v1343
    %v1350 = vadd.f32 %v1340, %v1343
    %v1351 = vmax.f32 %v1345, 0.0
    %v1352 = vmax.f32 %v1346, 0.0
    %v1353 = vmax.f32 %v1347, 0.0
    %v1354 = vmax.f32 %v1348, 0.0
    %v1355 = vmax.f32 %v1349, 0.0
    %v1356 = vmax.f32 %v1350, 0.0
    %v1357 = vld [vmem:[%s6] sm:$0x1]
    %v1358 = vmax.f32 %v1351, %v1352
    %v1360 = vrot.slane %v1358, 1
    %v1362 = vmax.f32 %v1358, %v1360
    %v1363 = vld [vmem:[%s5] sm:$0xff]
    %v1364 = vld [vmem:[%s5 + $0x8] sm:$0xff]
    %v1366 = vsel %vm574, %v1362, 0
    %1368 = vmatpush.msra.mxu0 0.0
    %1369 = vmatpush.msra.mxu0 0.0
    %1370 = vmatpush.msra.mxu0 0.0
    %1371 = vmatpush.msra.mxu0 0.0
    %1372 = vmatpush.msra.mxu0 0.0
    %1373 = vmatpush.msra.mxu0 0.0
    %1374 = vmatpush.msra.mxu0 0.0
    %1375 = vmatpush.msra.mxu0 0.0
    %1376 = vmatpush.msra.mxu0 0.0
    %1377 = vmatpush.msra.mxu0 0.0
    %1378 = vmatpush.msra.mxu0 0.0
    %1379 = vmatpush.msra.mxu0 0.0
    %1380 = vmatpush.msra.mxu0 0.0
    %1381 = vmatpush.msra.mxu0 0.0
    %1382 = vmatpush.msra.mxu0 %v1364
    %1383 = vmatpush.msra.mxu0 %v1363
    %1384 = vmatmul.f32.gmra.mxu0 %v1366
    %v1385 = vpop.f32.mrf.mxu0
    %v1386 = vadd.f32 0.0, %v1385
    %1387 = vdwg.mxu0
    %v1388 = vadd.f32 %v1357, %v1386
    %v1389 = vld [vmem:[%s599] sm:$0xff]
    %v1390 = vld [vmem:[%s599 + $0x8] sm:$0xff]
    %v1391 = vrot.slane %v1362, 2
    %v1392 = vsel %vm574, %v1391, 0
    %1394 = vmatpush.msra.mxu0 0.0
    %1395 = vmatpush.msra.mxu0 0.0
    %1396 = vmatpush.msra.mxu0 0.0
    %1397 = vmatpush.msra.mxu0 0.0
    %1398 = vmatpush.msra.mxu0 0.0
    %1399 = vmatpush.msra.mxu0 0.0
    %1400 = vmatpush.msra.mxu0 0.0
    %1401 = vmatpush.msra.mxu0 0.0
    %1402 = vmatpush.msra.mxu0 0.0
    %1403 = vmatpush.msra.mxu0 0.0
    %1404 = vmatpush.msra.mxu0 0.0
    %1405 = vmatpush.msra.mxu0 0.0
    %1406 = vmatpush.msra.mxu0 0.0
    %1407 = vmatpush.msra.mxu0 0.0
    %1408 = vmatpush.msra.mxu0 %v1390
    %1409 = vmatpush.msra.mxu0 %v1389
    %1410 = vmatmul.f32.gmra.mxu0 %v1392
    %v1411 = vpop.f32.mrf.mxu0
    %v1412 = vadd.f32 0.0, %v1411
    %1413 = vdwg.mxu0
    %v1414 = vadd.f32 %v1388, %v1412
    %v1415 = vld [vmem:[%s626] sm:$0xff]
    %v1416 = vld [vmem:[%s626 + $0x8] sm:$0xff]
    %v1417 = vrot.slane %v1362, 4
    %v1418 = vsel %vm574, %v1417, 0
    %1420 = vmatpush.msra.mxu0 0.0
    %1421 = vmatpush.msra.mxu0 0.0
    %1422 = vmatpush.msra.mxu0 0.0
    %1423 = vmatpush.msra.mxu0 0.0
    %1424 = vmatpush.msra.mxu0 0.0
    %1425 = vmatpush.msra.mxu0 0.0
    %1426 = vmatpush.msra.mxu0 0.0
    %1427 = vmatpush.msra.mxu0 0.0
    %1428 = vmatpush.msra.mxu0 0.0
    %1429 = vmatpush.msra.mxu0 0.0
    %1430 = vmatpush.msra.mxu0 0.0
    %1431 = vmatpush.msra.mxu0 0.0
    %1432 = vmatpush.msra.mxu0 0.0
    %1433 = vmatpush.msra.mxu0 0.0
    %1434 = vmatpush.msra.mxu0 %v1416
    %1435 = vmatpush.msra.mxu0 %v1415
    %1436 = vmatmul.f32.gmra.mxu0 %v1418
    %v1437 = vpop.f32.mrf.mxu0
    %v1438 = vadd.f32 0.0, %v1437
    %1439 = vdwg.mxu0
    %v1440 = vadd.f32 %v1414, %v1438
    %v1441 = vmax.f32 %v1353, %v1354
    %v1443 = vrot.slane %v1441, 1
    %v1445 = vmax.f32 %v1441, %v1443
    %v1446 = vld [vmem:[%s658] sm:$0xff]
    %v1447 = vld [vmem:[%s658 + $0x8] sm:$0xff]
    %v1449 = vsel %vm574, %v1445, 0
    %1451 = vmatpush.msra.mxu0 0.0
    %1452 = vmatpush.msra.mxu0 0.0
    %1453 = vmatpush.msra.mxu0 0.0
    %1454 = vmatpush.msra.mxu0 0.0
    %1455 = vmatpush.msra.mxu0 0.0
    %1456 = vmatpush.msra.mxu0 0.0
    %1457 = vmatpush.msra.mxu0 0.0
    %1458 = vmatpush.msra.mxu0 0.0
    %1459 = vmatpush.msra.mxu0 0.0
    %1460 = vmatpush.msra.mxu0 0.0
    %1461 = vmatpush.msra.mxu0 0.0
    %1462 = vmatpush.msra.mxu0 0.0
    %1463 = vmatpush.msra.mxu0 0.0
    %1464 = vmatpush.msra.mxu0 0.0
    %1465 = vmatpush.msra.mxu0 %v1447
    %1466 = vmatpush.msra.mxu0 %v1446
    %1467 = vmatmul.f32.gmra.mxu0 %v1449
    %v1468 = vpop.f32.mrf.mxu0
    %v1469 = vadd.f32 0.0, %v1468
    %1470 = vdwg.mxu0
    %v1471 = vadd.f32 %v1440, %v1469
    %v1472 = vld [vmem:[%s685] sm:$0xff]
    %v1473 = vld [vmem:[%s685 + $0x8] sm:$0xff]
    %v1474 = vrot.slane %v1445, 2
    %v1475 = vsel %vm574, %v1474, 0
    %1477 = vmatpush.msra.mxu0 0.0
    %1478 = vmatpush.msra.mxu0 0.0
    %1479 = vmatpush.msra.mxu0 0.0
    %1480 = vmatpush.msra.mxu0 0.0
    %1481 = vmatpush.msra.mxu0 0.0
    %1482 = vmatpush.msra.mxu0 0.0
    %1483 = vmatpush.msra.mxu0 0.0
    %1484 = vmatpush.msra.mxu0 0.0
    %1485 = vmatpush.msra.mxu0 0.0
    %1486 = vmatpush.msra.mxu0 0.0
    %1487 = vmatpush.msra.mxu0 0.0
    %1488 = vmatpush.msra.mxu0 0.0
    %1489 = vmatpush.msra.mxu0 0.0
    %1490 = vmatpush.msra.mxu0 0.0
    %1491 = vmatpush.msra.mxu0 %v1473
    %1492 = vmatpush.msra.mxu0 %v1472
    %1493 = vmatmul.f32.gmra.mxu0 %v1475
    %v1494 = vpop.f32.mrf.mxu0
    %v1495 = vadd.f32 0.0, %v1494
    %1496 = vdwg.mxu0
    %v1497 = vadd.f32 %v1471, %v1495
    %v1498 = vld [vmem:[%s712] sm:$0xff]
    %v1499 = vld [vmem:[%s712 + $0x8] sm:$0xff]
    %v1500 = vrot.slane %v1445, 4
    %v1501 = vsel %vm574, %v1500, 0
    %1503 = vmatpush.msra.mxu0 0.0
    %1504 = vmatpush.msra.mxu0 0.0
    %1505 = vmatpush.msra.mxu0 0.0
    %1506 = vmatpush.msra.mxu0 0.0
    %1507 = vmatpush.msra.mxu0 0.0
    %1508 = vmatpush.msra.mxu0 0.0
    %1509 = vmatpush.msra.mxu0 0.0
    %1510 = vmatpush.msra.mxu0 0.0
    %1511 = vmatpush.msra.mxu0 0.0
    %1512 = vmatpush.msra.mxu0 0.0
    %1513 = vmatpush.msra.mxu0 0.0
    %1514 = vmatpush.msra.mxu0 0.0
    %1515 = vmatpush.msra.mxu0 0.0
    %1516 = vmatpush.msra.mxu0 0.0
    %1517 = vmatpush.msra.mxu0 %v1499
    %1518 = vmatpush.msra.mxu0 %v1498
    %1519 = vmatmul.f32.gmra.mxu0 %v1501
    %v1520 = vpop.f32.mrf.mxu0
    %v1521 = vadd.f32 0.0, %v1520
    %1522 = vdwg.mxu0
    %v1523 = vadd.f32 %v1497, %v1521
    %v1524 = vmax.f32 %v1355, %v1356
    %v1526 = vrot.slane %v1524, 1
    %v1528 = vmax.f32 %v1524, %v1526
    %v1529 = vld [vmem:[%s744] sm:$0xff]
    %v1530 = vld [vmem:[%s744 + $0x8] sm:$0xff]
    %v1532 = vsel %vm574, %v1528, 0
    %1534 = vmatpush.msra.mxu0 0.0
    %1535 = vmatpush.msra.mxu0 0.0
    %1536 = vmatpush.msra.mxu0 0.0
    %1537 = vmatpush.msra.mxu0 0.0
    %1538 = vmatpush.msra.mxu0 0.0
    %1539 = vmatpush.msra.mxu0 0.0
    %1540 = vmatpush.msra.mxu0 0.0
    %1541 = vmatpush.msra.mxu0 0.0
    %1542 = vmatpush.msra.mxu0 0.0
    %1543 = vmatpush.msra.mxu0 0.0
    %1544 = vmatpush.msra.mxu0 0.0
    %1545 = vmatpush.msra.mxu0 0.0
    %1546 = vmatpush.msra.mxu0 0.0
    %1547 = vmatpush.msra.mxu0 0.0
    %1548 = vmatpush.msra.mxu0 %v1530
    %1549 = vmatpush.msra.mxu0 %v1529
    %1550 = vmatmul.f32.gmra.mxu0 %v1532
    %v1551 = vpop.f32.mrf.mxu0
    %v1552 = vadd.f32 0.0, %v1551
    %1553 = vdwg.mxu0
    %v1554 = vadd.f32 %v1523, %v1552
    %v1555 = vld [vmem:[%s771] sm:$0xff]
    %v1556 = vld [vmem:[%s771 + $0x8] sm:$0xff]
    %v1557 = vrot.slane %v1528, 2
    %v1558 = vsel %vm574, %v1557, 0
    %1560 = vmatpush.msra.mxu0 0.0
    %1561 = vmatpush.msra.mxu0 0.0
    %1562 = vmatpush.msra.mxu0 0.0
    %1563 = vmatpush.msra.mxu0 0.0
    %1564 = vmatpush.msra.mxu0 0.0
    %1565 = vmatpush.msra.mxu0 0.0
    %1566 = vmatpush.msra.mxu0 0.0
    %1567 = vmatpush.msra.mxu0 0.0
    %1568 = vmatpush.msra.mxu0 0.0
    %1569 = vmatpush.msra.mxu0 0.0
    %1570 = vmatpush.msra.mxu0 0.0
    %1571 = vmatpush.msra.mxu0 0.0
    %1572 = vmatpush.msra.mxu0 0.0
    %1573 = vmatpush.msra.mxu0 0.0
    %1574 = vmatpush.msra.mxu0 %v1556
    %1575 = vmatpush.msra.mxu0 %v1555
    %1576 = vmatmul.f32.gmra.mxu0 %v1558
    %v1577 = vpop.f32.mrf.mxu0
    %v1578 = vadd.f32 0.0, %v1577
    %1579 = vdwg.mxu0
    %v1580 = vadd.f32 %v1554, %v1578
    %v1581 = vld [vmem:[%s798] sm:$0xff]
    %v1582 = vld [vmem:[%s798 + $0x8] sm:$0xff]
    %v1583 = vrot.slane %v1528, 4
    %v1584 = vsel %vm574, %v1583, 0
    %1586 = vmatpush.msra.mxu0 0.0
    %1587 = vmatpush.msra.mxu0 0.0
    %1588 = vmatpush.msra.mxu0 0.0
    %1589 = vmatpush.msra.mxu0 0.0
    %1590 = vmatpush.msra.mxu0 0.0
    %1591 = vmatpush.msra.mxu0 0.0
    %1592 = vmatpush.msra.mxu0 0.0
    %1593 = vmatpush.msra.mxu0 0.0
    %1594 = vmatpush.msra.mxu0 0.0
    %1595 = vmatpush.msra.mxu0 0.0
    %1596 = vmatpush.msra.mxu0 0.0
    %1597 = vmatpush.msra.mxu0 0.0
    %1598 = vmatpush.msra.mxu0 0.0
    %1599 = vmatpush.msra.mxu0 0.0
    %1600 = vmatpush.msra.mxu0 %v1582
    %1601 = vmatpush.msra.mxu0 %v1581
    %1602 = vmatmul.f32.gmra.mxu0 %v1584
    %v1603 = vpop.f32.mrf.mxu0
    %v1604 = vadd.f32 0.0, %v1603
    %1605 = vdwg.mxu0
    %v1606 = vadd.f32 %v1580, %v1604
    %v1607 = vmax.f32 %v1606, 0.0
    %1608 = vst.msk [vmem:[#allocation2 + $0x1] sm:$0x1] %vm826, %v1607
    // Predicated region
    $region30: #{net_forward.1} parent=1 // pred_check
      _
    $region31: #{net_forward.1} parent=1 // pred_check_branch
      %1610 = sbr.rel (0) target = $region33
    $region32: #{net_forward.1} parent=1 // pred_region
      %1612 = vsyncadd [#allocation3], 0
      %s1614 = sshll.u32 [#allocation2], 4
      %s1615 = int_to_ptr.vmem [resolvable:$true] %s1614
      %s1616 = sshll.u32 %s7, 4
      %s1617 = int_to_ptr.hbm [resolvable:$true] %s1616
      %1619 = dma.vmem_to_hbm [thread:$0]  %s1615, 32, %s1617, [#allocation3]
    $region33: #{net_forward.1} parent=1 // pred_fallthru
      _
    // Predicated region
    $region34: #{net_forward.1} parent=1 // pred_check
      _
    $region35: #{net_forward.1} parent=1 // pred_check_branch
      %1621 = sbr.rel (0) target = $region37
    $region36: #{net_forward.1} parent=1 // pred_region
      %1623 = dma.done [#allocation3], 32
    $region37: #{net_forward.1} parent=1 // pred_fallthru
      _
    %1624 = vsyncpa [#allocation3], 1

</llo_original>
